<compile_context>
chip_gen: v6e
topology: v6e:2x2x1
jax: 0.10.0
libtpu: 0.0.40
codegen_flags: <defaults>
</compile_context>

<pallas_src>
import functools
import math

import numpy as np

import jax
import jax.numpy as jnp
from jax.experimental import pallas as pl
from jax.experimental.pallas import tpu as pltpu

LN_EPS = 1e-5


# ----------------------------------------------------------------------------
# Host-side cached constants (depend only on static shapes).
# ----------------------------------------------------------------------------
@functools.lru_cache(maxsize=None)
def _rotary_table(seq_len: int, emb: int):
    """[sin | cos] rotary table of shape (S, E), matching RotaryEmbedding."""
    inv_freq = 1.0 / (10000.0 ** (np.arange(0, emb, 2, dtype=np.float32) / emb))
    sinu = np.arange(seq_len, dtype=np.float32)[:, None] * inv_freq[None, :]
    tab = np.concatenate([np.sin(sinu), np.cos(sinu)], axis=-1)
    return jnp.asarray(tab, dtype=jnp.float32)


@functools.lru_cache(maxsize=None)
def _head_mask_table(seq_len: int, emb: int, nhead: int):
    """(H*S, E) 0/1 mask: row r belongs to head r//S, lane e to head e//dh."""
    dh = emb // nhead
    row_head = np.arange(nhead * seq_len, dtype=np.int32)[:, None] // seq_len
    col_head = np.arange(emb, dtype=np.int32)[None, :] // dh
    return jnp.asarray((row_head == col_head).astype(np.float32))


# ----------------------------------------------------------------------------
# Pallas kernel: one batch element per grid step, whole layer fused.
# ----------------------------------------------------------------------------
def _roformer_layer_kernel(
    x_ref,          # (S, E)    input slab for this batch element
    sincos_ref,     # (S, E)    [sin | cos] rotary table (shared)
    attn_mask_ref,  # (S, S)    additive attention mask (shared)
    kpm_ref,        # (B, S)    additive key-padding rows (whole batch)
    head_mask_ref,  # (H*S, E)  constant block-diagonal head mask
    wqk_ref, bqk_ref,   # (E, 2E), (1, 2E)  fused q|k proj, q half pre-scaled
    wv_ref, bv_ref,     # (E, E),  (1, E)
    wo_ref, bo_ref,     # (E, E),  (1, E)
    w1_ref, b1_ref,     # (E, FF), (1, FF)
    w2_ref, b2_ref,     # (FF, E), (1, E)
    g1_ref, be1_ref,    # LayerNorm1 affine (1, E)
    g2_ref, be2_ref,    # LayerNorm2 affine (1, E)
    out_ref,        # (S, E)
    *, nhead: int,
):
    x = x_ref[...]                          # (S, E)
    S, E = x.shape
    half = E // 2

    # --- rotary position embedding on the full embedding (q & k path) -------
    sincos = sincos_ref[...]
    sin, cos = sincos[:, :half], sincos[:, half:]
    x1, x2 = x[:, :half], x[:, half:]
    rot = jnp.concatenate([x1 * cos + x2 * sin, x2 * cos - x1 * sin], axis=-1)

    # --- fused q|k in-projection (scale folded into q half), v from raw x ---
    qk = jnp.dot(rot, wqk_ref[...], preferred_element_type=jnp.float32) + bqk_ref[...]
    q = qk[:, :E]
    k = qk[:, E:]
    v = jnp.dot(x, wv_ref[...], preferred_element_type=jnp.float32) + bv_ref[...]

    # --- all heads at once: heads batched along sublanes ---------------------
    # Row r = (h, s) of q_rep carries q[s] restricted to head h's lanes, so a
    # single matmul against k^T gives every head's (S, S) score block and a
    # single softmax pass (max/exp/sum/recip) is amortized over all heads.
    head_mask = head_mask_ref[...]                               # (H*S, E)
    q_rep = jnp.concatenate([q] * nhead, axis=0) * head_mask     # (H*S, E)
    scores = jnp.einsum("re,te->rt", q_rep, k,
                        preferred_element_type=jnp.float32)      # (H*S, S)

    # additive mask assembled in-kernel (no (B,S,S) tensor in HBM)
    b = pl.program_id(0)
    amask = attn_mask_ref[...] + kpm_ref[pl.ds(b, 1), :]         # (S, S)
    scores = scores + jnp.concatenate([amask] * nhead, axis=0)   # (H*S, S)

    scores = scores - jnp.max(scores, axis=-1, keepdims=True)
    p = jnp.exp(scores)
    p = p * pl.reciprocal(jnp.sum(p, axis=-1, keepdims=True), approx=True)

    # context for all heads; off-head lanes are killed by the mask and the
    # per-head blocks are folded back with sublane slices + adds.
    ctx_all = jnp.dot(p, v, preferred_element_type=jnp.float32) * head_mask
    ctx = ctx_all[:S, :]
    for h in range(1, nhead):
        ctx = ctx + ctx_all[h * S:(h + 1) * S, :]                # (S, E)

    attn_out = jnp.dot(ctx, wo_ref[...], preferred_element_type=jnp.float32) + bo_ref[...]

    # --- residual + LayerNorm 1 (rsqrt on the EUP) ----------------------------
    y = x + attn_out
    mu = jnp.mean(y, axis=-1, keepdims=True)
    var = jnp.mean((y - mu) ** 2, axis=-1, keepdims=True)
    y = (y - mu) * jax.lax.rsqrt(var + LN_EPS) * g1_ref[...] + be1_ref[...]

    # --- feed-forward ---------------------------------------------------------
    ff = jnp.dot(y, w1_ref[...], preferred_element_type=jnp.float32) + b1_ref[...]
    ff = jnp.maximum(ff, 0.0)
    ff = jnp.dot(ff, w2_ref[...], preferred_element_type=jnp.float32) + b2_ref[...]

    # --- residual + LayerNorm 2 ----------------------------------------------
    z = y + ff
    mu2 = jnp.mean(z, axis=-1, keepdims=True)
    var2 = jnp.mean((z - mu2) ** 2, axis=-1, keepdims=True)
    z = (z - mu2) * jax.lax.rsqrt(var2 + LN_EPS) * g2_ref[...] + be2_ref[...]

    out_ref[...] = z


# ----------------------------------------------------------------------------
# Wrapper: constant tables, weight fusion, pallas_call
# ----------------------------------------------------------------------------
def roformer_encoder_layer(src, src_mask, src_key_padding_mask, params, nhead):
    """src: (S, B, E) f32 (seq-first, like batch_first=False);
    src_mask: (S, S) additive f32; src_key_padding_mask: (B, S) bool."""
    S, B, E = src.shape
    assert E % nhead == 0
    dh = E // nhead
    scale = 1.0 / math.sqrt(dh)

    # (S, B, E) -> (B, S, E): kept wrapper-side so every BlockSpec keeps its
    # last two dims equal to the full array dims (always legal on Mosaic).
    x = jnp.transpose(src, (1, 0, 2)).astype(jnp.float32)

    sincos = _rotary_table(S, E)                     # cached, no per-call XLA
    head_mask = _head_mask_table(S, E, nhead)        # cached constant
    attn_mask = src_mask.astype(jnp.float32)
    kpm_add = jnp.where(src_key_padding_mask, -1e9, 0.0).astype(jnp.float32)

    # Fused q|k projection; softmax scale folded into the q half.
    # (In a real model these would be pre-fused offline.)
    wqk = jnp.concatenate([params["wq"] * scale, params["wk"]], axis=1)   # (E, 2E)
    bqk = jnp.concatenate([params["bq"] * scale, params["bk"]], axis=1)   # (1, 2E)

    weights = [wqk, bqk, params["wv"], params["bv"], params["wo"], params["bo"],
               params["w1"], params["b1"], params["w2"], params["b2"],
               params["g1"], params["be1"], params["g2"], params["be2"]]

    def full_spec(arr):
        return pl.BlockSpec(arr.shape, lambda b, _n=arr.ndim: (0,) * _n)

    in_specs = (
        [pl.BlockSpec((None, S, E), lambda b: (b, 0, 0))]        # x, one batch elem
        + [full_spec(a) for a in (sincos, attn_mask, kpm_add, head_mask)]
        + [full_spec(w) for w in weights]
    )

    out_bse = pl.pallas_call(
        functools.partial(_roformer_layer_kernel, nhead=nhead),
        out_shape=jax.ShapeDtypeStruct((B, S, E), jnp.float32),
        grid=(B,),
        in_specs=in_specs,
        out_specs=pl.BlockSpec((None, S, E), lambda b: (b, 0, 0)),
        compiler_params=pltpu.CompilerParams(dimension_semantics=("parallel",)),
    )(x, sincos, attn_mask, kpm_add, head_mask, *weights)

    return jnp.transpose(out_bse, (1, 0, 2))                     # (S, B, E)


# ----------------------------------------------------------------------------
# Pure-JAX reference (mirrors the PyTorch forward) for validation
# ----------------------------------------------------------------------------
def roformer_reference(src, src_mask, src_key_padding_mask, params, nhead):
    S, B, E = src.shape
    half = E // 2
    dh = E // nhead
    x = jnp.transpose(src, (1, 0, 2)).astype(jnp.float32)        # (B, S, E)

    inv_freq = 1.0 / (10000.0 ** (jnp.arange(0, E, 2, dtype=jnp.float32) / E))
    pos = jnp.arange(S, dtype=jnp.float32)
    sinu = pos[:, None] * inv_freq[None, :]
    sin, cos = jnp.sin(sinu), jnp.cos(sinu)

    def rot(t):
        t1, t2 = t[..., :half], t[..., half:]
        return jnp.concatenate([t1 * cos + t2 * sin, t2 * cos - t1 * sin], axis=-1)

    q = rot(x) @ params["wq"] + params["bq"][0]
    k = rot(x) @ params["wk"] + params["bk"][0]
    v = x @ params["wv"] + params["bv"][0]

    qh = q.reshape(B, S, nhead, dh).transpose(0, 2, 1, 3)
    kh = k.reshape(B, S, nhead, dh).transpose(0, 2, 1, 3)
    vh = v.reshape(B, S, nhead, dh).transpose(0, 2, 1, 3)

    kpm_add = jnp.where(src_key_padding_mask, -1e9, 0.0)
    scores = jnp.einsum("bhqd,bhkd->bhqk", qh, kh) / math.sqrt(dh)
    scores = scores + src_mask[None, None] + kpm_add[:, None, None, :]
    p = jax.nn.softmax(scores, axis=-1)
    ctx = jnp.einsum("bhqk,bhkd->bhqd", p, vh).transpose(0, 2, 1, 3).reshape(B, S, E)
    attn_out = ctx @ params["wo"] + params["bo"][0]

    def layernorm(t, g, b):
        mu = jnp.mean(t, axis=-1, keepdims=True)
        var = jnp.mean((t - mu) ** 2, axis=-1, keepdims=True)
        return (t - mu) / jnp.sqrt(var + LN_EPS) * g + b

    y = layernorm(x + attn_out, params["g1"][0], params["be1"][0])
    ff = jax.nn.relu(y @ params["w1"] + params["b1"][0]) @ params["w2"] + params["b2"][0]
    z = layernorm(y + ff, params["g2"][0], params["be2"][0])
    return jnp.transpose(z, (1, 0, 2))


# ----------------------------------------------------------------------------
# Main
# ----------------------------------------------------------------------------
if __name__ == "__main__":
    S, B, E, H, FF = 8, 2, 32, 4, 64     # seq, batch, emb_size, nhead, dim_feedforward

    key = jax.random.PRNGKey(0)
    ks = jax.random.split(key, 24)

    def nrm(k, shape, scale=0.05):
        return (scale * jax.random.normal(k, shape)).astype(jnp.float32)

    # weights stored as (in, out) so the kernel computes x @ W + b
    params = {
        "wq": nrm(ks[0], (E, E)),  "bq": nrm(ks[1], (1, E)),
        "wk": nrm(ks[2], (E, E)),  "bk": nrm(ks[3], (1, E)),
        "wv": nrm(ks[4], (E, E)),  "bv": nrm(ks[5], (1, E)),
        "wo": nrm(ks[6], (E, E)),  "bo": nrm(ks[7], (1, E)),
        "w1": nrm(ks[8], (E, FF)), "b1": nrm(ks[9], (1, FF)),
        "w2": nrm(ks[10], (FF, E)), "b2": nrm(ks[11], (1, E)),
        "g1": (1.0 + nrm(ks[12], (1, E), 0.1)), "be1": nrm(ks[13], (1, E), 0.1),
        "g2": (1.0 + nrm(ks[14], (1, E), 0.1)), "be2": nrm(ks[15], (1, E), 0.1),
    }

    src = jax.random.normal(ks[16], (S, B, E), dtype=jnp.float32)
    # causal additive float mask + one padded key position in batch 1
    causal = jnp.arange(S)[None, :] > jnp.arange(S)[:, None]
    src_mask = jnp.where(causal, -1e9, 0.0).astype(jnp.float32)
    src_key_padding_mask = jnp.zeros((B, S), dtype=bool).at[1, S - 1].set(True)

    out = roformer_encoder_layer(src, src_mask, src_key_padding_mask, params, H)
    out = jax.block_until_ready(out)

    ref = roformer_reference(src, src_mask, src_key_padding_mask, params, H)
    assert out.shape == (S, B, E)
    max_diff = float(jnp.max(jnp.abs(out - ref)))
    # tolerance loosened slightly for the EUP approximate reciprocal in softmax
    assert jnp.allclose(out, ref, atol=2e-3, rtol=2e-3), max_diff

    print("KERNEL_OK")
</pallas_src>

<mosaic_0001>
module attributes {stable_mosaic.version = 11 : i64} {
  func.func @_roformer_layer_kernel(%arg0: i32, %arg1: memref<1x8x32xf32, #tpu.memory_space<vmem>>, %arg2: memref<8x32xf32, #tpu.memory_space<vmem>>, %arg3: memref<8x8xf32, #tpu.memory_space<vmem>>, %arg4: memref<2x8xf32, #tpu.memory_space<vmem>>, %arg5: memref<32x32xf32, #tpu.memory_space<vmem>>, %arg6: memref<32x64xf32, #tpu.memory_space<vmem>>, %arg7: memref<1x64xf32, #tpu.memory_space<vmem>>, %arg8: memref<32x32xf32, #tpu.memory_space<vmem>>, %arg9: memref<1x32xf32, #tpu.memory_space<vmem>>, %arg10: memref<32x32xf32, #tpu.memory_space<vmem>>, %arg11: memref<1x32xf32, #tpu.memory_space<vmem>>, %arg12: memref<32x64xf32, #tpu.memory_space<vmem>>, %arg13: memref<1x64xf32, #tpu.memory_space<vmem>>, %arg14: memref<64x32xf32, #tpu.memory_space<vmem>>, %arg15: memref<1x32xf32, #tpu.memory_space<vmem>>, %arg16: memref<1x32xf32, #tpu.memory_space<vmem>>, %arg17: memref<1x32xf32, #tpu.memory_space<vmem>>, %arg18: memref<1x32xf32, #tpu.memory_space<vmem>>, %arg19: memref<1x32xf32, #tpu.memory_space<vmem>>, %arg20: memref<1x8x32xf32, #tpu.memory_space<vmem>>) attributes {dimension_semantics = [#tpu.dimension_semantics<parallel>], iteration_bounds = array<i64: 2>, scalar_prefetch = 0 : i64, scratch_operands = 0 : i64, tpu.core_type = #tpu.core_type<tc>, window_params = [{transform_indices = @transform_0, window_bounds = array<i64: 1, 8, 32>}, {pipeline_mode = #tpu.pipeline_mode<synchronous>, transform_indices = @transform_1, window_bounds = array<i64: 8, 32>}, {pipeline_mode = #tpu.pipeline_mode<synchronous>, transform_indices = @transform_2, window_bounds = array<i64: 8, 8>}, {pipeline_mode = #tpu.pipeline_mode<synchronous>, transform_indices = @transform_3, window_bounds = array<i64: 2, 8>}, {pipeline_mode = #tpu.pipeline_mode<synchronous>, transform_indices = @transform_4, window_bounds = array<i64: 32, 32>}, {pipeline_mode = #tpu.pipeline_mode<synchronous>, transform_indices = @transform_5, window_bounds = array<i64: 32, 64>}, {pipeline_mode = #tpu.pipeline_mode<synchronous>, transform_indices = @transform_6, window_bounds = array<i64: 1, 64>}, {pipeline_mode = #tpu.pipeline_mode<synchronous>, transform_indices = @transform_7, window_bounds = array<i64: 32, 32>}, {pipeline_mode = #tpu.pipeline_mode<synchronous>, transform_indices = @transform_8, window_bounds = array<i64: 1, 32>}, {pipeline_mode = #tpu.pipeline_mode<synchronous>, transform_indices = @transform_9, window_bounds = array<i64: 32, 32>}, {pipeline_mode = #tpu.pipeline_mode<synchronous>, transform_indices = @transform_10, window_bounds = array<i64: 1, 32>}, {pipeline_mode = #tpu.pipeline_mode<synchronous>, transform_indices = @transform_11, window_bounds = array<i64: 32, 64>}, {pipeline_mode = #tpu.pipeline_mode<synchronous>, transform_indices = @transform_12, window_bounds = array<i64: 1, 64>}, {pipeline_mode = #tpu.pipeline_mode<synchronous>, transform_indices = @transform_13, window_bounds = array<i64: 64, 32>}, {pipeline_mode = #tpu.pipeline_mode<synchronous>, transform_indices = @transform_14, window_bounds = array<i64: 1, 32>}, {pipeline_mode = #tpu.pipeline_mode<synchronous>, transform_indices = @transform_15, window_bounds = array<i64: 1, 32>}, {pipeline_mode = #tpu.pipeline_mode<synchronous>, transform_indices = @transform_16, window_bounds = array<i64: 1, 32>}, {pipeline_mode = #tpu.pipeline_mode<synchronous>, transform_indices = @transform_17, window_bounds = array<i64: 1, 32>}, {pipeline_mode = #tpu.pipeline_mode<synchronous>, transform_indices = @transform_18, window_bounds = array<i64: 1, 32>}, {transform_indices = @transform_19, window_bounds = array<i64: 1, 8, 32>}]} {
    %c0 = arith.constant 0 : index
    %c0_0 = arith.constant 0 : index
    %c0_1 = arith.constant 0 : index
    %0 = vector.load %arg1[%c0, %c0_0, %c0_1] : memref<1x8x32xf32, #tpu.memory_space<vmem>>, vector<1x8x32xf32>
    %1 = vector.shape_cast %0 : vector<1x8x32xf32> to vector<8x32xf32>
    %c0_2 = arith.constant 0 : index
    %c0_3 = arith.constant 0 : index
    %2 = vector.load %arg2[%c0_2, %c0_3] : memref<8x32xf32, #tpu.memory_space<vmem>>, vector<8x32xf32>
    %3 = vector.extract_strided_slice %2 {offsets = [0, 0], sizes = [8, 16], strides = [1, 1]} : vector<8x32xf32> to vector<8x16xf32>
    %4 = vector.extract_strided_slice %2 {offsets = [0, 16], sizes = [8, 16], strides = [1, 1]} : vector<8x32xf32> to vector<8x16xf32>
    %5 = vector.extract_strided_slice %1 {offsets = [0, 0], sizes = [8, 16], strides = [1, 1]} : vector<8x32xf32> to vector<8x16xf32>
    %6 = vector.extract_strided_slice %1 {offsets = [0, 16], sizes = [8, 16], strides = [1, 1]} : vector<8x32xf32> to vector<8x16xf32>
    %7 = arith.mulf %5, %4 : vector<8x16xf32>
    %8 = arith.mulf %6, %3 : vector<8x16xf32>
    %9 = arith.addf %7, %8 : vector<8x16xf32>
    %10 = arith.mulf %6, %4 : vector<8x16xf32>
    %11 = arith.mulf %5, %3 : vector<8x16xf32>
    %12 = arith.subf %10, %11 : vector<8x16xf32>
    %13 = tpu.concatenate %9, %12 in 1 : vector<8x16xf32>, vector<8x16xf32> -> vector<8x32xf32>
    %c0_4 = arith.constant 0 : index
    %c0_5 = arith.constant 0 : index
    %14 = vector.load %arg6[%c0_4, %c0_5] : memref<32x64xf32, #tpu.memory_space<vmem>>, vector<32x64xf32>
    %cst = arith.constant dense<0.000000e+00> : vector<8x64xf32>
    %15 = tpu.matmul %13, %14, %cst {dimension_numbers = #tpu.dot_dimension_numbers<[1], [0], [0], [1], [0, 0, 1, 1], [], []>} : vector<8x32xf32>, vector<32x64xf32>, vector<8x64xf32> -> vector<8x64xf32>
    %c0_6 = arith.constant 0 : index
    %c0_7 = arith.constant 0 : index
    %16 = vector.load %arg7[%c0_6, %c0_7] : memref<1x64xf32, #tpu.memory_space<vmem>>, vector<1x64xf32>
    %17 = vector.broadcast %16 : vector<1x64xf32> to vector<8x64xf32>
    %18 = arith.addf %15, %17 : vector<8x64xf32>
    %19 = vector.extract_strided_slice %18 {offsets = [0, 0], sizes = [8, 32], strides = [1, 1]} : vector<8x64xf32> to vector<8x32xf32>
    %20 = vector.extract_strided_slice %18 {offsets = [0, 32], sizes = [8, 32], strides = [1, 1]} : vector<8x64xf32> to vector<8x32xf32>
    %c0_8 = arith.constant 0 : index
    %c0_9 = arith.constant 0 : index
    %21 = vector.load %arg8[%c0_8, %c0_9] : memref<32x32xf32, #tpu.memory_space<vmem>>, vector<32x32xf32>
    %cst_10 = arith.constant dense<0.000000e+00> : vector<8x32xf32>
    %22 = tpu.matmul %1, %21, %cst_10 {dimension_numbers = #tpu.dot_dimension_numbers<[1], [0], [0], [1], [0, 0, 1, 1], [], []>} : vector<8x32xf32>, vector<32x32xf32>, vector<8x32xf32> -> vector<8x32xf32>
    %c0_11 = arith.constant 0 : index
    %c0_12 = arith.constant 0 : index
    %23 = vector.load %arg9[%c0_11, %c0_12] : memref<1x32xf32, #tpu.memory_space<vmem>>, vector<1x32xf32>
    %24 = vector.broadcast %23 : vector<1x32xf32> to vector<8x32xf32>
    %25 = arith.addf %22, %24 : vector<8x32xf32>
    %c0_13 = arith.constant 0 : index
    %c0_14 = arith.constant 0 : index
    %26 = vector.load %arg5[%c0_13, %c0_14] : memref<32x32xf32, #tpu.memory_space<vmem>>, vector<32x32xf32>
    %27 = tpu.concatenate %19, %19, %19, %19 in 0 : vector<8x32xf32>, vector<8x32xf32>, vector<8x32xf32>, vector<8x32xf32> -> vector<32x32xf32>
    %28 = arith.mulf %27, %26 : vector<32x32xf32>
    "tpu.trace_start"() <{level = 10 : i32, message = "re,te->rt"}> : () -> ()
    %cst_15 = arith.constant dense<0.000000e+00> : vector<32x8xf32>
    %29 = tpu.matmul %28, %20, %cst_15 {dimension_numbers = #tpu.dot_dimension_numbers<[1], [1], [0], [0], [0, 0, 1, 0], [], []>} : vector<32x32xf32>, vector<8x32xf32>, vector<32x8xf32> -> vector<32x8xf32>
    "tpu.trace_stop"() : () -> ()
    %c0_16 = arith.constant 0 : index
    %c0_17 = arith.constant 0 : index
    %30 = vector.load %arg3[%c0_16, %c0_17] : memref<8x8xf32, #tpu.memory_space<vmem>>, vector<8x8xf32>
    %31 = arith.index_cast %arg0 : i32 to index
    %c0_18 = arith.constant 0 : index
    %32 = vector.load %arg4[%31, %c0_18] : memref<2x8xf32, #tpu.memory_space<vmem>>, vector<1x8xf32>
    %33 = vector.broadcast %32 : vector<1x8xf32> to vector<8x8xf32>
    %34 = arith.addf %30, %33 : vector<8x8xf32>
    %35 = tpu.concatenate %34, %34, %34, %34 in 0 : vector<8x8xf32>, vector<8x8xf32>, vector<8x8xf32>, vector<8x8xf32> -> vector<32x8xf32>
    %36 = arith.addf %29, %35 : vector<32x8xf32>
    %cst_19 = arith.constant dense<0xFF800000> : vector<32xf32>
    %37 = vector.multi_reduction <maximumf>, %36, %cst_19 [1] : vector<32x8xf32> to vector<32xf32>
    %38 = vector.shape_cast %37 : vector<32xf32> to vector<32x1xf32>
    %39 = vector.broadcast %38 : vector<32x1xf32> to vector<32x8xf32>
    %40 = arith.subf %36, %39 : vector<32x8xf32>
    %41 = math.exp %40 : vector<32x8xf32>
    %cst_20 = arith.constant dense<0.000000e+00> : vector<32xf32>
    %42 = vector.multi_reduction <add>, %41, %cst_20 [1] : vector<32x8xf32> to vector<32xf32>
    %43 = vector.shape_cast %42 : vector<32xf32> to vector<32x1xf32>
    %44 = tpu.reciprocal %43 {approx = true} : vector<32x1xf32> -> vector<32x1xf32>
    %45 = vector.broadcast %44 : vector<32x1xf32> to vector<32x8xf32>
    %46 = arith.mulf %41, %45 : vector<32x8xf32>
    %cst_21 = arith.constant dense<0.000000e+00> : vector<32x32xf32>
    %47 = tpu.matmul %46, %25, %cst_21 {dimension_numbers = #tpu.dot_dimension_numbers<[1], [0], [0], [1], [0, 0, 1, 1], [], []>} : vector<32x8xf32>, vector<8x32xf32>, vector<32x32xf32> -> vector<32x32xf32>
    %48 = arith.mulf %47, %26 : vector<32x32xf32>
    %49 = vector.extract_strided_slice %48 {offsets = [0, 0], sizes = [8, 32], strides = [1, 1]} : vector<32x32xf32> to vector<8x32xf32>
    %50 = vector.extract_strided_slice %48 {offsets = [8, 0], sizes = [8, 32], strides = [1, 1]} : vector<32x32xf32> to vector<8x32xf32>
    %51 = arith.addf %49, %50 : vector<8x32xf32>
    %52 = vector.extract_strided_slice %48 {offsets = [16, 0], sizes = [8, 32], strides = [1, 1]} : vector<32x32xf32> to vector<8x32xf32>
    %53 = arith.addf %51, %52 : vector<8x32xf32>
    %54 = vector.extract_strided_slice %48 {offsets = [24, 0], sizes = [8, 32], strides = [1, 1]} : vector<32x32xf32> to vector<8x32xf32>
    %55 = arith.addf %53, %54 : vector<8x32xf32>
    %c0_22 = arith.constant 0 : index
    %c0_23 = arith.constant 0 : index
    %56 = vector.load %arg10[%c0_22, %c0_23] : memref<32x32xf32, #tpu.memory_space<vmem>>, vector<32x32xf32>
    %cst_24 = arith.constant dense<0.000000e+00> : vector<8x32xf32>
    %57 = tpu.matmul %55, %56, %cst_24 {dimension_numbers = #tpu.dot_dimension_numbers<[1], [0], [0], [1], [0, 0, 1, 1], [], []>} : vector<8x32xf32>, vector<32x32xf32>, vector<8x32xf32> -> vector<8x32xf32>
    %c0_25 = arith.constant 0 : index
    %c0_26 = arith.constant 0 : index
    %58 = vector.load %arg11[%c0_25, %c0_26] : memref<1x32xf32, #tpu.memory_space<vmem>>, vector<1x32xf32>
    %59 = vector.broadcast %58 : vector<1x32xf32> to vector<8x32xf32>
    %60 = arith.addf %57, %59 : vector<8x32xf32>
    %61 = arith.addf %1, %60 : vector<8x32xf32>
    %cst_27 = arith.constant dense<0.000000e+00> : vector<8xf32>
    %62 = vector.multi_reduction <add>, %61, %cst_27 [1] : vector<8x32xf32> to vector<8xf32>
    %63 = vector.shape_cast %62 : vector<8xf32> to vector<8x1xf32>
    %cst_28 = arith.constant 3.200000e+01 : f32
    %64 = vector.broadcast %cst_28 : f32 to vector<8x1xf32>
    %65 = arith.divf %63, %64 : vector<8x1xf32>
    %66 = vector.broadcast %65 : vector<8x1xf32> to vector<8x32xf32>
    %67 = arith.subf %61, %66 : vector<8x32xf32>
    %68 = arith.mulf %67, %67 : vector<8x32xf32>
    %cst_29 = arith.constant dense<0.000000e+00> : vector<8xf32>
    %69 = vector.multi_reduction <add>, %68, %cst_29 [1] : vector<8x32xf32> to vector<8xf32>
    %70 = vector.shape_cast %69 : vector<8xf32> to vector<8x1xf32>
    %cst_30 = arith.constant 3.200000e+01 : f32
    %71 = vector.broadcast %cst_30 : f32 to vector<8x1xf32>
    %72 = arith.divf %70, %71 : vector<8x1xf32>
    %73 = vector.broadcast %65 : vector<8x1xf32> to vector<8x32xf32>
    %74 = arith.subf %61, %73 : vector<8x32xf32>
    %cst_31 = arith.constant 9.99999974E-6 : f32
    %75 = vector.broadcast %cst_31 : f32 to vector<8x1xf32>
    %76 = arith.addf %72, %75 : vector<8x1xf32>
    %77 = math.rsqrt %76 : vector<8x1xf32>
    %78 = vector.broadcast %77 : vector<8x1xf32> to vector<8x32xf32>
    %79 = arith.mulf %74, %78 : vector<8x32xf32>
    %c0_32 = arith.constant 0 : index
    %c0_33 = arith.constant 0 : index
    %80 = vector.load %arg16[%c0_32, %c0_33] : memref<1x32xf32, #tpu.memory_space<vmem>>, vector<1x32xf32>
    %81 = vector.broadcast %80 : vector<1x32xf32> to vector<8x32xf32>
    %82 = arith.mulf %79, %81 : vector<8x32xf32>
    %c0_34 = arith.constant 0 : index
    %c0_35 = arith.constant 0 : index
    %83 = vector.load %arg17[%c0_34, %c0_35] : memref<1x32xf32, #tpu.memory_space<vmem>>, vector<1x32xf32>
    %84 = vector.broadcast %83 : vector<1x32xf32> to vector<8x32xf32>
    %85 = arith.addf %82, %84 : vector<8x32xf32>
    %c0_36 = arith.constant 0 : index
    %c0_37 = arith.constant 0 : index
    %86 = vector.load %arg12[%c0_36, %c0_37] : memref<32x64xf32, #tpu.memory_space<vmem>>, vector<32x64xf32>
    %cst_38 = arith.constant dense<0.000000e+00> : vector<8x64xf32>
    %87 = tpu.matmul %85, %86, %cst_38 {dimension_numbers = #tpu.dot_dimension_numbers<[1], [0], [0], [1], [0, 0, 1, 1], [], []>} : vector<8x32xf32>, vector<32x64xf32>, vector<8x64xf32> -> vector<8x64xf32>
    %c0_39 = arith.constant 0 : index
    %c0_40 = arith.constant 0 : index
    %88 = vector.load %arg13[%c0_39, %c0_40] : memref<1x64xf32, #tpu.memory_space<vmem>>, vector<1x64xf32>
    %89 = vector.broadcast %88 : vector<1x64xf32> to vector<8x64xf32>
    %90 = arith.addf %87, %89 : vector<8x64xf32>
    %cst_41 = arith.constant 0.000000e+00 : f32
    %91 = vector.broadcast %cst_41 : f32 to vector<8x64xf32>
    %92 = arith.maximumf %90, %91 : vector<8x64xf32>
    %c0_42 = arith.constant 0 : index
    %c0_43 = arith.constant 0 : index
    %93 = vector.load %arg14[%c0_42, %c0_43] : memref<64x32xf32, #tpu.memory_space<vmem>>, vector<64x32xf32>
    %cst_44 = arith.constant dense<0.000000e+00> : vector<8x32xf32>
    %94 = tpu.matmul %92, %93, %cst_44 {dimension_numbers = #tpu.dot_dimension_numbers<[1], [0], [0], [1], [0, 0, 1, 1], [], []>} : vector<8x64xf32>, vector<64x32xf32>, vector<8x32xf32> -> vector<8x32xf32>
    %c0_45 = arith.constant 0 : index
    %c0_46 = arith.constant 0 : index
    %95 = vector.load %arg15[%c0_45, %c0_46] : memref<1x32xf32, #tpu.memory_space<vmem>>, vector<1x32xf32>
    %96 = vector.broadcast %95 : vector<1x32xf32> to vector<8x32xf32>
    %97 = arith.addf %94, %96 : vector<8x32xf32>
    %98 = arith.addf %85, %97 : vector<8x32xf32>
    %cst_47 = arith.constant dense<0.000000e+00> : vector<8xf32>
    %99 = vector.multi_reduction <add>, %98, %cst_47 [1] : vector<8x32xf32> to vector<8xf32>
    %100 = vector.shape_cast %99 : vector<8xf32> to vector<8x1xf32>
    %cst_48 = arith.constant 3.200000e+01 : f32
    %101 = vector.broadcast %cst_48 : f32 to vector<8x1xf32>
    %102 = arith.divf %100, %101 : vector<8x1xf32>
    %103 = vector.broadcast %102 : vector<8x1xf32> to vector<8x32xf32>
    %104 = arith.subf %98, %103 : vector<8x32xf32>
    %105 = arith.mulf %104, %104 : vector<8x32xf32>
    %cst_49 = arith.constant dense<0.000000e+00> : vector<8xf32>
    %106 = vector.multi_reduction <add>, %105, %cst_49 [1] : vector<8x32xf32> to vector<8xf32>
    %107 = vector.shape_cast %106 : vector<8xf32> to vector<8x1xf32>
    %cst_50 = arith.constant 3.200000e+01 : f32
    %108 = vector.broadcast %cst_50 : f32 to vector<8x1xf32>
    %109 = arith.divf %107, %108 : vector<8x1xf32>
    %110 = vector.broadcast %102 : vector<8x1xf32> to vector<8x32xf32>
    %111 = arith.subf %98, %110 : vector<8x32xf32>
    %cst_51 = arith.constant 9.99999974E-6 : f32
    %112 = vector.broadcast %cst_51 : f32 to vector<8x1xf32>
    %113 = arith.addf %109, %112 : vector<8x1xf32>
    %114 = math.rsqrt %113 : vector<8x1xf32>
    %115 = vector.broadcast %114 : vector<8x1xf32> to vector<8x32xf32>
    %116 = arith.mulf %111, %115 : vector<8x32xf32>
    %c0_52 = arith.constant 0 : index
    %c0_53 = arith.constant 0 : index
    %117 = vector.load %arg18[%c0_52, %c0_53] : memref<1x32xf32, #tpu.memory_space<vmem>>, vector<1x32xf32>
    %118 = vector.broadcast %117 : vector<1x32xf32> to vector<8x32xf32>
    %119 = arith.mulf %116, %118 : vector<8x32xf32>
    %c0_54 = arith.constant 0 : index
    %c0_55 = arith.constant 0 : index
    %120 = vector.load %arg19[%c0_54, %c0_55] : memref<1x32xf32, #tpu.memory_space<vmem>>, vector<1x32xf32>
    %121 = vector.broadcast %120 : vector<1x32xf32> to vector<8x32xf32>
    %122 = arith.addf %119, %121 : vector<8x32xf32>
    %c0_56 = arith.constant 0 : index
    %c0_57 = arith.constant 0 : index
    %c0_58 = arith.constant 0 : index
    %123 = vector.load %arg20[%c0_56, %c0_57, %c0_58] : memref<1x8x32xf32, #tpu.memory_space<vmem>>, vector<1x8x32xf32>
    %124 = vector.shape_cast %123 : vector<1x8x32xf32> to vector<8x32xf32>
    %125 = vector.shape_cast %122 : vector<8x32xf32> to vector<1x8x32xf32>
    tpu.vector_store %arg20[%c0_56, %c0_57, %c0_58], %125 {strides = array<i32>} : memref<1x8x32xf32, #tpu.memory_space<vmem>>, vector<1x8x32xf32>,
    return
  }
  func.func @transform_0(%arg0: i32) -> (i32, i32, i32) {
    %c0_i32 = arith.constant 0 : i32
    %c0_i32_0 = arith.constant 0 : i32
    %c0_i32_1 = arith.constant 0 : i32
    return %arg0, %c0_i32, %c0_i32_0 : i32, i32, i32
  }
  func.func @transform_1(%arg0: i32) -> (i32, i32) {
    %c0_i32 = arith.constant 0 : i32
    %c0_i32_0 = arith.constant 0 : i32
    %c0_i32_1 = arith.constant 0 : i32
    return %c0_i32, %c0_i32_0 : i32, i32
  }
  func.func @transform_2(%arg0: i32) -> (i32, i32) {
    %c0_i32 = arith.constant 0 : i32
    %c0_i32_0 = arith.constant 0 : i32
    %c0_i32_1 = arith.constant 0 : i32
    return %c0_i32, %c0_i32_0 : i32, i32
  }
  func.func @transform_3(%arg0: i32) -> (i32, i32) {
    %c0_i32 = arith.constant 0 : i32
    %c0_i32_0 = arith.constant 0 : i32
    %c0_i32_1 = arith.constant 0 : i32
    return %c0_i32, %c0_i32_0 : i32, i32
  }
  func.func @transform_4(%arg0: i32) -> (i32, i32) {
    %c0_i32 = arith.constant 0 : i32
    %c0_i32_0 = arith.constant 0 : i32
    %c0_i32_1 = arith.constant 0 : i32
    return %c0_i32, %c0_i32_0 : i32, i32
  }
  func.func @transform_5(%arg0: i32) -> (i32, i32) {
    %c0_i32 = arith.constant 0 : i32
    %c0_i32_0 = arith.constant 0 : i32
    %c0_i32_1 = arith.constant 0 : i32
    return %c0_i32, %c0_i32_0 : i32, i32
  }
  func.func @transform_6(%arg0: i32) -> (i32, i32) {
    %c0_i32 = arith.constant 0 : i32
    %c0_i32_0 = arith.constant 0 : i32
    %c0_i32_1 = arith.constant 0 : i32
    return %c0_i32, %c0_i32_0 : i32, i32
  }
  func.func @transform_7(%arg0: i32) -> (i32, i32) {
    %c0_i32 = arith.constant 0 : i32
    %c0_i32_0 = arith.constant 0 : i32
    %c0_i32_1 = arith.constant 0 : i32
    return %c0_i32, %c0_i32_0 : i32, i32
  }
  func.func @transform_8(%arg0: i32) -> (i32, i32) {
    %c0_i32 = arith.constant 0 : i32
    %c0_i32_0 = arith.constant 0 : i32
    %c0_i32_1 = arith.constant 0 : i32
    return %c0_i32, %c0_i32_0 : i32, i32
  }
  func.func @transform_9(%arg0: i32) -> (i32, i32) {
    %c0_i32 = arith.constant 0 : i32
    %c0_i32_0 = arith.constant 0 : i32
    %c0_i32_1 = arith.constant 0 : i32
    return %c0_i32, %c0_i32_0 : i32, i32
  }
  func.func @transform_10(%arg0: i32) -> (i32, i32) {
    %c0_i32 = arith.constant 0 : i32
    %c0_i32_0 = arith.constant 0 : i32
    %c0_i32_1 = arith.constant 0 : i32
    return %c0_i32, %c0_i32_0 : i32, i32
  }
  func.func @transform_11(%arg0: i32) -> (i32, i32) {
    %c0_i32 = arith.constant 0 : i32
    %c0_i32_0 = arith.constant 0 : i32
    %c0_i32_1 = arith.constant 0 : i32
    return %c0_i32, %c0_i32_0 : i32, i32
  }
  func.func @transform_12(%arg0: i32) -> (i32, i32) {
    %c0_i32 = arith.constant 0 : i32
    %c0_i32_0 = arith.constant 0 : i32
    %c0_i32_1 = arith.constant 0 : i32
    return %c0_i32, %c0_i32_0 : i32, i32
  }
  func.func @transform_13(%arg0: i32) -> (i32, i32) {
    %c0_i32 = arith.constant 0 : i32
    %c0_i32_0 = arith.constant 0 : i32
    %c0_i32_1 = arith.constant 0 : i32
    return %c0_i32, %c0_i32_0 : i32, i32
  }
  func.func @transform_14(%arg0: i32) -> (i32, i32) {
    %c0_i32 = arith.constant 0 : i32
    %c0_i32_0 = arith.constant 0 : i32
    %c0_i32_1 = arith.constant 0 : i32
    return %c0_i32, %c0_i32_0 : i32, i32
  }
  func.func @transform_15(%arg0: i32) -> (i32, i32) {
    %c0_i32 = arith.constant 0 : i32
    %c0_i32_0 = arith.constant 0 : i32
    %c0_i32_1 = arith.constant 0 : i32
    return %c0_i32, %c0_i32_0 : i32, i32
  }
  func.func @transform_16(%arg0: i32) -> (i32, i32) {
    %c0_i32 = arith.constant 0 : i32
    %c0_i32_0 = arith.constant 0 : i32
    %c0_i32_1 = arith.constant 0 : i32
    return %c0_i32, %c0_i32_0 : i32, i32
  }
  func.func @transform_17(%arg0: i32) -> (i32, i32) {
    %c0_i32 = arith.constant 0 : i32
    %c0_i32_0 = arith.constant 0 : i32
    %c0_i32_1 = arith.constant 0 : i32
    return %c0_i32, %c0_i32_0 : i32, i32
  }
  func.func @transform_18(%arg0: i32) -> (i32, i32) {
    %c0_i32 = arith.constant 0 : i32
    %c0_i32_0 = arith.constant 0 : i32
    %c0_i32_1 = arith.constant 0 : i32
    return %c0_i32, %c0_i32_0 : i32, i32
  }
  func.func @transform_19(%arg0: i32) -> (i32, i32, i32) {
    %c0_i32 = arith.constant 0 : i32
    %c0_i32_0 = arith.constant 0 : i32
    %c0_i32_1 = arith.constant 0 : i32
    return %arg0, %c0_i32, %c0_i32_0 : i32, i32, i32
  }
}

</mosaic_0001>

<llo_original>
// kernel: tpu_custom_call.1
$region0: #{tpu_custom_call.1}
  #allocation0 [shape = 'u32[]', space=smem, size = 0x4, offset = 0x4, fixed_abs, tag = 'smem constant byte address 0x4 - core index']
  #allocation1 [shape = 'u32[144,128]{1,0:T(1,128)}', space=vmem, size = 0x12000, scoped, tag = 'internal scratch']
  %s0 = inlined_call_operand.hbm [shape: f32[2,8,32], index: 0, kind: input, shape index: {}]
  %s1 = inlined_call_operand.hbm [shape: f32[8,32], index: 1, kind: input, shape index: {}]
  %s2 = inlined_call_operand.hbm [shape: f32[8,8], index: 2, kind: input, shape index: {}]
  %s3 = inlined_call_operand.vmem [shape: f32[2,8], index: 3, kind: input, shape index: {}]
  %s4 = inlined_call_operand.vmem [shape: f32[32,32], index: 4, kind: input, shape index: {}]
  %s5 = inlined_call_operand.vmem [shape: f32[32,64], index: 5, kind: input, shape index: {}]
  %s6 = inlined_call_operand.vmem [shape: f32[1,64], index: 6, kind: input, shape index: {}]
  %s7 = inlined_call_operand.vmem [shape: f32[32,32], index: 7, kind: input, shape index: {}]
  %s8 = inlined_call_operand.vmem [shape: f32[1,32], index: 8, kind: input, shape index: {}]
  %s9 = inlined_call_operand.hbm [shape: f32[32,32], index: 9, kind: input, shape index: {}]
  %s10 = inlined_call_operand.vmem [shape: f32[1,32], index: 10, kind: input, shape index: {}]
  %s11 = inlined_call_operand.hbm [shape: f32[32,64], index: 11, kind: input, shape index: {}]
  %s12 = inlined_call_operand.vmem [shape: f32[1,64], index: 12, kind: input, shape index: {}]
  %s13 = inlined_call_operand.vmem [shape: f32[64,32], index: 13, kind: input, shape index: {}]
  %s14 = inlined_call_operand.vmem [shape: f32[1,32], index: 14, kind: input, shape index: {}]
  %s15 = inlined_call_operand.vmem [shape: f32[1,32], index: 15, kind: input, shape index: {}]
  %s16 = inlined_call_operand.vmem [shape: f32[1,32], index: 16, kind: input, shape index: {}]
  %s17 = inlined_call_operand.vmem [shape: f32[1,32], index: 17, kind: input, shape index: {}]
  %s18 = inlined_call_operand.vmem [shape: f32[1,32], index: 18, kind: input, shape index: {}]
  %s19 = inlined_call_operand.hbm [shape: f32[2,8,32], index: 19, kind: output, shape index: {}]
  %s20 = sld [smem:[#allocation0]]
  $region129: #{tpu_custom_call.1} parent=0
    _
  %s22 = ssub.s32 1, %s20
  %s23 = scalar_select 0, %s22, %s20
  $region1: #{tpu_custom_call.1} parent=0
    #allocation2 [shape = 'u8[8192]{0}', space=vmem, size = 0x2000, scoped, tag = 'input window, operand 0']
    #allocation3 [shape = 's32[2]{0}', space=sflag, size = 0x8, scoped, tag = 'scoped memory for tpu_custom_call.1']
    #allocation4 [shape = 's32[2]{0}', space=sflag, size = 0x8, scoped, tag = 'scoped memory for tpu_custom_call.1']
    #allocation5 [shape = 'u8[4096]{0}', space=vmem, size = 0x1000, scoped, tag = 'input window, operand 1, single buffered']
    #allocation6 [shape = 's32[1]{0}', space=sflag, size = 0x4, scoped, tag = 'scoped memory for tpu_custom_call.1']
    #allocation7 [shape = 'u8[4096]{0}', space=vmem, size = 0x1000, scoped, tag = 'input window, operand 2, single buffered']
    #allocation8 [shape = 'u8[16384]{0}', space=vmem, size = 0x4000, scoped, tag = 'input window, operand 9, single buffered']
    #allocation9 [shape = 's32[1]{0}', space=sflag, size = 0x4, scoped, tag = 'scoped memory for tpu_custom_call.1']
    #allocation10 [shape = 'u8[16384]{0}', space=vmem, size = 0x4000, scoped, tag = 'input window, operand 11, single buffered']
    #allocation11 [shape = 'u8[8192]{0}', space=vmem, size = 0x2000, scoped, tag = 'output window, operand 0']
    %24 = vsyncpa [#allocation3], 0
    %s25 = scalar_lea.sflag [#allocation3], 1
    %26 = vsyncpa %s25, 0
    %27 = vsyncpa [#allocation6], 0
    %28 = vsyncpa [#allocation9], 0
    %29 = vsyncpa [#allocation4], 0
    %s30 = scalar_lea.sflag [#allocation4], 1
    %31 = vsyncpa %s30, 0
    loop: start=0, step=1, limit=4
    $region2: #{tpu_custom_call.1} parent=1 // loop_pre_header
      _
    $region3: #{tpu_custom_call.1} parent=1 // loop_header
      %s33 = sphi 0, %s37
      %p34 = scmp.ge.s32.totalorder %s33, 4
      %s43 = sphi 0, %s45
      %s46 = sphi 0, %s43
      %s47 = sphi 0, %s46
      %s63 = sphi 0, %s47
      %s67 = sphi 0, %s67
      %s69 = sphi 0, %s67
      %s70 = sphi 0, %s69
      %s84 = sphi 0, %s70
      %s88 = sphi 0, %s88
      %s90 = sphi 0, %s88
      %s91 = sphi 0, %s90
      %s105 = sphi 0, %s91
      %s109 = sphi 0, %s109
      %s111 = sphi 0, %s109
      %s112 = sphi 0, %s111
      %s126 = sphi 0, %s112
      %s130 = sphi 0, %s130
      %s132 = sphi 0, %s130
      %s133 = sphi 0, %s132
      %s147 = sphi 0, %s133
      %s151 = sphi 0, %s151
      %s153 = sphi 0, %s151
      %s154 = sphi 0, %s153
      %s168 = sphi 0, %s154
      %s172 = sphi 0, %s172
      %s174 = sphi 0, %s172
      %s175 = sphi 0, %s174
      %s189 = sphi 0, %s175
      %s193 = sphi 0, %s193
      %s195 = sphi 0, %s193
      %s196 = sphi 0, %s195
      %s210 = sphi 0, %s196
      %s214 = sphi 0, %s214
      %s216 = sphi 0, %s214
      %s217 = sphi 0, %s216
      %s231 = sphi 0, %s217
      %s235 = sphi 0, %s235
      %s237 = sphi 0, %s235
      %s238 = sphi 0, %s237
      %s252 = sphi 0, %s238
      %s256 = sphi 0, %s256
      %s258 = sphi 0, %s256
      %s259 = sphi 0, %s258
      %s273 = sphi 0, %s259
      %s277 = sphi 0, %s277
      %s279 = sphi 0, %s277
      %s280 = sphi 0, %s279
      %s294 = sphi 0, %s280
      %s298 = sphi 0, %s298
      %s300 = sphi 0, %s298
      %s301 = sphi 0, %s300
      %s315 = sphi 0, %s301
      %s319 = sphi 0, %s319
      %s321 = sphi 0, %s319
      %s322 = sphi 0, %s321
      %s336 = sphi 0, %s322
      %s340 = sphi 0, %s340
      %s342 = sphi 0, %s340
      %s343 = sphi 0, %s342
      %s357 = sphi 0, %s343
      %s361 = sphi 0, %s361
      %s363 = sphi 0, %s361
      %s364 = sphi 0, %s363
      %s378 = sphi 0, %s364
      %s382 = sphi 0, %s382
      %s384 = sphi 0, %s382
      %s385 = sphi 0, %s384
      %s399 = sphi 0, %s385
      %s403 = sphi 0, %s403
      %s405 = sphi 0, %s403
      %s406 = sphi 0, %s405
      %s420 = sphi 0, %s406
      %s424 = sphi 0, %s424
      %s426 = sphi 0, %s424
      %s427 = sphi 0, %s426
      %s441 = sphi 0, %s427
      %s447 = sphi 0, %s449
      %s450 = sphi 0, %s447
      %s451 = sphi 0, %s450
      %s467 = sphi 0, %s451
    $region4: #{tpu_custom_call.1} parent=1 // loop_header_branch
      %36 = sbr.rel (%p34) target = $region8
    $region5: #{tpu_custom_call.1} parent=1 // loop_body
      %s38 = ssub.s32 %s33, 1
      %s39 = ssub.s32 %s33, 2
      %s40 = sadd.s32 %s33, 1
      %s41 = ssub.s32 %s33, %s40
      %p42 = scmp.eq.s32.totalorder %s41, 0
      %s44 = sadd.s32 %s43, 1
      %s45 = scalar_select %p42, %s43, %s44
      %p48 = pneg %p42
      %p49 = scmp.eq.s32.totalorder %s33, 1
      %p50 = por %p48, %p49
      %p51 = scmp.ne.s32.totalorder %s43, %s46
      %p52 = scmp.eq.s32.totalorder %s33, 0
      %p53 = por %p51, %p52
      %p54 = scmp.ne.s32.totalorder %s43, %s46
      %p55 = scmp.eq.s32.totalorder %s38, 1
      %p56 = por %p54, %p55
      %p57 = scmp.ne.s32.totalorder %s46, %s47
      %p58 = scmp.eq.s32.totalorder %s38, 0
      %p59 = por %p57, %p58
      %p60 = scmp.ne.s32.totalorder %s46, %s47
      %p61 = scmp.eq.s32.totalorder %s39, 1
      %p62 = por %p60, %p61
      %p64 = scmp.ne.s32.totalorder %s47, %s63
      %p65 = scmp.eq.s32.totalorder %s39, 0
      %p66 = por %p64, %p65
      %s68 = sadd.s32 %s67, 1
      %p71 = scmp.eq.s32.totalorder %s33, 1
      %p72 = scmp.ne.s32.totalorder %s67, %s69
      %p73 = scmp.eq.s32.totalorder %s33, 0
      %p74 = por %p72, %p73
      %p75 = scmp.ne.s32.totalorder %s67, %s69
      %p76 = scmp.eq.s32.totalorder %s38, 1
      %p77 = por %p75, %p76
      %p78 = scmp.ne.s32.totalorder %s69, %s70
      %p79 = scmp.eq.s32.totalorder %s38, 0
      %p80 = por %p78, %p79
      %p81 = scmp.ne.s32.totalorder %s69, %s70
      %p82 = scmp.eq.s32.totalorder %s39, 1
      %p83 = por %p81, %p82
      %p85 = scmp.ne.s32.totalorder %s70, %s84
      %p86 = scmp.eq.s32.totalorder %s39, 0
      %p87 = por %p85, %p86
      %s89 = sadd.s32 %s88, 1
      %p92 = scmp.eq.s32.totalorder %s33, 1
      %p93 = scmp.ne.s32.totalorder %s88, %s90
      %p94 = scmp.eq.s32.totalorder %s33, 0
      %p95 = por %p93, %p94
      %p96 = scmp.ne.s32.totalorder %s88, %s90
      %p97 = scmp.eq.s32.totalorder %s38, 1
      %p98 = por %p96, %p97
      %p99 = scmp.ne.s32.totalorder %s90, %s91
      %p100 = scmp.eq.s32.totalorder %s38, 0
      %p101 = por %p99, %p100
      %p102 = scmp.ne.s32.totalorder %s90, %s91
      %p103 = scmp.eq.s32.totalorder %s39, 1
      %p104 = por %p102, %p103
      %p106 = scmp.ne.s32.totalorder %s91, %s105
      %p107 = scmp.eq.s32.totalorder %s39, 0
      %p108 = por %p106, %p107
      %s110 = sadd.s32 %s109, 1
      %p113 = scmp.eq.s32.totalorder %s33, 1
      %p114 = scmp.ne.s32.totalorder %s109, %s111
      %p115 = scmp.eq.s32.totalorder %s33, 0
      %p116 = por %p114, %p115
      %p117 = scmp.ne.s32.totalorder %s109, %s111
      %p118 = scmp.eq.s32.totalorder %s38, 1
      %p119 = por %p117, %p118
      %p120 = scmp.ne.s32.totalorder %s111, %s112
      %p121 = scmp.eq.s32.totalorder %s38, 0
      %p122 = por %p120, %p121
      %p123 = scmp.ne.s32.totalorder %s111, %s112
      %p124 = scmp.eq.s32.totalorder %s39, 1
      %p125 = por %p123, %p124
      %p127 = scmp.ne.s32.totalorder %s112, %s126
      %p128 = scmp.eq.s32.totalorder %s39, 0
      %p129 = por %p127, %p128
      %s131 = sadd.s32 %s130, 1
      %p134 = scmp.eq.s32.totalorder %s33, 1
      %p135 = scmp.ne.s32.totalorder %s130, %s132
      %p136 = scmp.eq.s32.totalorder %s33, 0
      %p137 = por %p135, %p136
      %p138 = scmp.ne.s32.totalorder %s130, %s132
      %p139 = scmp.eq.s32.totalorder %s38, 1
      %p140 = por %p138, %p139
      %p141 = scmp.ne.s32.totalorder %s132, %s133
      %p142 = scmp.eq.s32.totalorder %s38, 0
      %p143 = por %p141, %p142
      %p144 = scmp.ne.s32.totalorder %s132, %s133
      %p145 = scmp.eq.s32.totalorder %s39, 1
      %p146 = por %p144, %p145
      %p148 = scmp.ne.s32.totalorder %s133, %s147
      %p149 = scmp.eq.s32.totalorder %s39, 0
      %p150 = por %p148, %p149
      %s152 = sadd.s32 %s151, 1
      %p155 = scmp.eq.s32.totalorder %s33, 1
      %p156 = scmp.ne.s32.totalorder %s151, %s153
      %p157 = scmp.eq.s32.totalorder %s33, 0
      %p158 = por %p156, %p157
      %p159 = scmp.ne.s32.totalorder %s151, %s153
      %p160 = scmp.eq.s32.totalorder %s38, 1
      %p161 = por %p159, %p160
      %p162 = scmp.ne.s32.totalorder %s153, %s154
      %p163 = scmp.eq.s32.totalorder %s38, 0
      %p164 = por %p162, %p163
      %p165 = scmp.ne.s32.totalorder %s153, %s154
      %p166 = scmp.eq.s32.totalorder %s39, 1
      %p167 = por %p165, %p166
      %p169 = scmp.ne.s32.totalorder %s154, %s168
      %p170 = scmp.eq.s32.totalorder %s39, 0
      %p171 = por %p169, %p170
      %s173 = sadd.s32 %s172, 1
      %p176 = scmp.eq.s32.totalorder %s33, 1
      %p177 = scmp.ne.s32.totalorder %s172, %s174
      %p178 = scmp.eq.s32.totalorder %s33, 0
      %p179 = por %p177, %p178
      %p180 = scmp.ne.s32.totalorder %s172, %s174
      %p181 = scmp.eq.s32.totalorder %s38, 1
      %p182 = por %p180, %p181
      %p183 = scmp.ne.s32.totalorder %s174, %s175
      %p184 = scmp.eq.s32.totalorder %s38, 0
      %p185 = por %p183, %p184
      %p186 = scmp.ne.s32.totalorder %s174, %s175
      %p187 = scmp.eq.s32.totalorder %s39, 1
      %p188 = por %p186, %p187
      %p190 = scmp.ne.s32.totalorder %s175, %s189
      %p191 = scmp.eq.s32.totalorder %s39, 0
      %p192 = por %p190, %p191
      %s194 = sadd.s32 %s193, 1
      %p197 = scmp.eq.s32.totalorder %s33, 1
      %p198 = scmp.ne.s32.totalorder %s193, %s195
      %p199 = scmp.eq.s32.totalorder %s33, 0
      %p200 = por %p198, %p199
      %p201 = scmp.ne.s32.totalorder %s193, %s195
      %p202 = scmp.eq.s32.totalorder %s38, 1
      %p203 = por %p201, %p202
      %p204 = scmp.ne.s32.totalorder %s195, %s196
      %p205 = scmp.eq.s32.totalorder %s38, 0
      %p206 = por %p204, %p205
      %p207 = scmp.ne.s32.totalorder %s195, %s196
      %p208 = scmp.eq.s32.totalorder %s39, 1
      %p209 = por %p207, %p208
      %p211 = scmp.ne.s32.totalorder %s196, %s210
      %p212 = scmp.eq.s32.totalorder %s39, 0
      %p213 = por %p211, %p212
      %s215 = sadd.s32 %s214, 1
      %p218 = scmp.eq.s32.totalorder %s33, 1
      %p219 = scmp.ne.s32.totalorder %s214, %s216
      %p220 = scmp.eq.s32.totalorder %s33, 0
      %p221 = por %p219, %p220
      %p222 = scmp.ne.s32.totalorder %s214, %s216
      %p223 = scmp.eq.s32.totalorder %s38, 1
      %p224 = por %p222, %p223
      %p225 = scmp.ne.s32.totalorder %s216, %s217
      %p226 = scmp.eq.s32.totalorder %s38, 0
      %p227 = por %p225, %p226
      %p228 = scmp.ne.s32.totalorder %s216, %s217
      %p229 = scmp.eq.s32.totalorder %s39, 1
      %p230 = por %p228, %p229
      %p232 = scmp.ne.s32.totalorder %s217, %s231
      %p233 = scmp.eq.s32.totalorder %s39, 0
      %p234 = por %p232, %p233
      %s236 = sadd.s32 %s235, 1
      %p239 = scmp.eq.s32.totalorder %s33, 1
      %p240 = scmp.ne.s32.totalorder %s235, %s237
      %p241 = scmp.eq.s32.totalorder %s33, 0
      %p242 = por %p240, %p241
      %p243 = scmp.ne.s32.totalorder %s235, %s237
      %p244 = scmp.eq.s32.totalorder %s38, 1
      %p245 = por %p243, %p244
      %p246 = scmp.ne.s32.totalorder %s237, %s238
      %p247 = scmp.eq.s32.totalorder %s38, 0
      %p248 = por %p246, %p247
      %p249 = scmp.ne.s32.totalorder %s237, %s238
      %p250 = scmp.eq.s32.totalorder %s39, 1
      %p251 = por %p249, %p250
      %p253 = scmp.ne.s32.totalorder %s238, %s252
      %p254 = scmp.eq.s32.totalorder %s39, 0
      %p255 = por %p253, %p254
      %s257 = sadd.s32 %s256, 1
      %p260 = scmp.eq.s32.totalorder %s33, 1
      %p261 = scmp.ne.s32.totalorder %s256, %s258
      %p262 = scmp.eq.s32.totalorder %s33, 0
      %p263 = por %p261, %p262
      %p264 = scmp.ne.s32.totalorder %s256, %s258
      %p265 = scmp.eq.s32.totalorder %s38, 1
      %p266 = por %p264, %p265
      %p267 = scmp.ne.s32.totalorder %s258, %s259
      %p268 = scmp.eq.s32.totalorder %s38, 0
      %p269 = por %p267, %p268
      %p270 = scmp.ne.s32.totalorder %s258, %s259
      %p271 = scmp.eq.s32.totalorder %s39, 1
      %p272 = por %p270, %p271
      %p274 = scmp.ne.s32.totalorder %s259, %s273
      %p275 = scmp.eq.s32.totalorder %s39, 0
      %p276 = por %p274, %p275
      %s278 = sadd.s32 %s277, 1
      %p281 = scmp.eq.s32.totalorder %s33, 1
      %p282 = scmp.ne.s32.totalorder %s277, %s279
      %p283 = scmp.eq.s32.totalorder %s33, 0
      %p284 = por %p282, %p283
      %p285 = scmp.ne.s32.totalorder %s277, %s279
      %p286 = scmp.eq.s32.totalorder %s38, 1
      %p287 = por %p285, %p286
      %p288 = scmp.ne.s32.totalorder %s279, %s280
      %p289 = scmp.eq.s32.totalorder %s38, 0
      %p290 = por %p288, %p289
      %p291 = scmp.ne.s32.totalorder %s279, %s280
      %p292 = scmp.eq.s32.totalorder %s39, 1
      %p293 = por %p291, %p292
      %p295 = scmp.ne.s32.totalorder %s280, %s294
      %p296 = scmp.eq.s32.totalorder %s39, 0
      %p297 = por %p295, %p296
      %s299 = sadd.s32 %s298, 1
      %p302 = scmp.eq.s32.totalorder %s33, 1
      %p303 = scmp.ne.s32.totalorder %s298, %s300
      %p304 = scmp.eq.s32.totalorder %s33, 0
      %p305 = por %p303, %p304
      %p306 = scmp.ne.s32.totalorder %s298, %s300
      %p307 = scmp.eq.s32.totalorder %s38, 1
      %p308 = por %p306, %p307
      %p309 = scmp.ne.s32.totalorder %s300, %s301
      %p310 = scmp.eq.s32.totalorder %s38, 0
      %p311 = por %p309, %p310
      %p312 = scmp.ne.s32.totalorder %s300, %s301
      %p313 = scmp.eq.s32.totalorder %s39, 1
      %p314 = por %p312, %p313
      %p316 = scmp.ne.s32.totalorder %s301, %s315
      %p317 = scmp.eq.s32.totalorder %s39, 0
      %p318 = por %p316, %p317
      %s320 = sadd.s32 %s319, 1
      %p323 = scmp.eq.s32.totalorder %s33, 1
      %p324 = scmp.ne.s32.totalorder %s319, %s321
      %p325 = scmp.eq.s32.totalorder %s33, 0
      %p326 = por %p324, %p325
      %p327 = scmp.ne.s32.totalorder %s319, %s321
      %p328 = scmp.eq.s32.totalorder %s38, 1
      %p329 = por %p327, %p328
      %p330 = scmp.ne.s32.totalorder %s321, %s322
      %p331 = scmp.eq.s32.totalorder %s38, 0
      %p332 = por %p330, %p331
      %p333 = scmp.ne.s32.totalorder %s321, %s322
      %p334 = scmp.eq.s32.totalorder %s39, 1
      %p335 = por %p333, %p334
      %p337 = scmp.ne.s32.totalorder %s322, %s336
      %p338 = scmp.eq.s32.totalorder %s39, 0
      %p339 = por %p337, %p338
      %s341 = sadd.s32 %s340, 1
      %p344 = scmp.eq.s32.totalorder %s33, 1
      %p345 = scmp.ne.s32.totalorder %s340, %s342
      %p346 = scmp.eq.s32.totalorder %s33, 0
      %p347 = por %p345, %p346
      %p348 = scmp.ne.s32.totalorder %s340, %s342
      %p349 = scmp.eq.s32.totalorder %s38, 1
      %p350 = por %p348, %p349
      %p351 = scmp.ne.s32.totalorder %s342, %s343
      %p352 = scmp.eq.s32.totalorder %s38, 0
      %p353 = por %p351, %p352
      %p354 = scmp.ne.s32.totalorder %s342, %s343
      %p355 = scmp.eq.s32.totalorder %s39, 1
      %p356 = por %p354, %p355
      %p358 = scmp.ne.s32.totalorder %s343, %s357
      %p359 = scmp.eq.s32.totalorder %s39, 0
      %p360 = por %p358, %p359
      %s362 = sadd.s32 %s361, 1
      %p365 = scmp.eq.s32.totalorder %s33, 1
      %p366 = scmp.ne.s32.totalorder %s361, %s363
      %p367 = scmp.eq.s32.totalorder %s33, 0
      %p368 = por %p366, %p367
      %p369 = scmp.ne.s32.totalorder %s361, %s363
      %p370 = scmp.eq.s32.totalorder %s38, 1
      %p371 = por %p369, %p370
      %p372 = scmp.ne.s32.totalorder %s363, %s364
      %p373 = scmp.eq.s32.totalorder %s38, 0
      %p374 = por %p372, %p373
      %p375 = scmp.ne.s32.totalorder %s363, %s364
      %p376 = scmp.eq.s32.totalorder %s39, 1
      %p377 = por %p375, %p376
      %p379 = scmp.ne.s32.totalorder %s364, %s378
      %p380 = scmp.eq.s32.totalorder %s39, 0
      %p381 = por %p379, %p380
      %s383 = sadd.s32 %s382, 1
      %p386 = scmp.eq.s32.totalorder %s33, 1
      %p387 = scmp.ne.s32.totalorder %s382, %s384
      %p388 = scmp.eq.s32.totalorder %s33, 0
      %p389 = por %p387, %p388
      %p390 = scmp.ne.s32.totalorder %s382, %s384
      %p391 = scmp.eq.s32.totalorder %s38, 1
      %p392 = por %p390, %p391
      %p393 = scmp.ne.s32.totalorder %s384, %s385
      %p394 = scmp.eq.s32.totalorder %s38, 0
      %p395 = por %p393, %p394
      %p396 = scmp.ne.s32.totalorder %s384, %s385
      %p397 = scmp.eq.s32.totalorder %s39, 1
      %p398 = por %p396, %p397
      %p400 = scmp.ne.s32.totalorder %s385, %s399
      %p401 = scmp.eq.s32.totalorder %s39, 0
      %p402 = por %p400, %p401
      %s404 = sadd.s32 %s403, 1
      %p407 = scmp.eq.s32.totalorder %s33, 1
      %p408 = scmp.ne.s32.totalorder %s403, %s405
      %p409 = scmp.eq.s32.totalorder %s33, 0
      %p410 = por %p408, %p409
      %p411 = scmp.ne.s32.totalorder %s403, %s405
      %p412 = scmp.eq.s32.totalorder %s38, 1
      %p413 = por %p411, %p412
      %p414 = scmp.ne.s32.totalorder %s405, %s406
      %p415 = scmp.eq.s32.totalorder %s38, 0
      %p416 = por %p414, %p415
      %p417 = scmp.ne.s32.totalorder %s405, %s406
      %p418 = scmp.eq.s32.totalorder %s39, 1
      %p419 = por %p417, %p418
      %p421 = scmp.ne.s32.totalorder %s406, %s420
      %p422 = scmp.eq.s32.totalorder %s39, 0
      %p423 = por %p421, %p422
      %s425 = sadd.s32 %s424, 1
      %p428 = scmp.eq.s32.totalorder %s33, 1
      %p429 = scmp.ne.s32.totalorder %s424, %s426
      %p430 = scmp.eq.s32.totalorder %s33, 0
      %p431 = por %p429, %p430
      %p432 = scmp.ne.s32.totalorder %s424, %s426
      %p433 = scmp.eq.s32.totalorder %s38, 1
      %p434 = por %p432, %p433
      %p435 = scmp.ne.s32.totalorder %s426, %s427
      %p436 = scmp.eq.s32.totalorder %s38, 0
      %p437 = por %p435, %p436
      %p438 = scmp.ne.s32.totalorder %s426, %s427
      %p439 = scmp.eq.s32.totalorder %s39, 1
      %p440 = por %p438, %p439
      %p442 = scmp.ne.s32.totalorder %s427, %s441
      %p443 = scmp.eq.s32.totalorder %s39, 0
      %p444 = por %p442, %p443
      %s445 = ssub.s32 %s33, %s40
      %p446 = scmp.eq.s32.totalorder %s445, 0
      %s448 = sadd.s32 %s447, 1
      %s449 = scalar_select %p446, %s447, %s448
      %p452 = pneg %p446
      %p453 = scmp.eq.s32.totalorder %s33, 1
      %p454 = por %p452, %p453
      %p455 = scmp.ne.s32.totalorder %s447, %s450
      %p456 = scmp.eq.s32.totalorder %s33, 0
      %p457 = por %p455, %p456
      %p458 = scmp.ne.s32.totalorder %s447, %s450
      %p459 = scmp.eq.s32.totalorder %s38, 1
      %p460 = por %p458, %p459
      %p461 = scmp.ne.s32.totalorder %s450, %s451
      %p462 = scmp.eq.s32.totalorder %s38, 0
      %p463 = por %p461, %p462
      %p464 = scmp.ne.s32.totalorder %s450, %s451
      %p465 = scmp.eq.s32.totalorder %s39, 1
      %p466 = por %p464, %p465
      %p468 = scmp.ne.s32.totalorder %s451, %s467
      %p469 = scmp.eq.s32.totalorder %s39, 0
      %p470 = por %p468, %p469
      %p471 = scmp.le.s32.totalorder 1, %s33
      %p472 = scmp.lt.s32.totalorder %s33, 3
      %p473 = pnand %p471, %p472
      %p474 = pneg %p473
      // Predicated region
      $region9: #{tpu_custom_call.1} parent=5 // pred_check
        _
      $region10: #{tpu_custom_call.1} parent=5 // pred_check_branch
        %476 = sbr.rel (%p473) target = $region12
      $region11: #{tpu_custom_call.1} parent=5 // pred_region
        %s477 = ssub.s32 %s33, 1
        // Predicated region
        $region13: #{tpu_custom_call.1} parent=11 // pred_check
          %p478 = pneg %p80
        $region14: #{tpu_custom_call.1} parent=11 // pred_check_branch
          %480 = sbr.rel (%p478) target = $region16
        $region15: #{tpu_custom_call.1} parent=11 // pred_region
          %s482 = ssub.s32 128, 128
          %483 = vsyncadd [#allocation6], %s482
          %s485 = sshll.u32 [#allocation5], 4
          %s486 = int_to_ptr.vmem [resolvable:$true] %s485
          %488 = dma.hbm_to_vmem [thread:$0]  %s1, 128, %s486, [#allocation6]
        $region16: #{tpu_custom_call.1} parent=11 // pred_fallthru
          _
        // Predicated region
        $region17: #{tpu_custom_call.1} parent=11 // pred_check
          %p489 = pneg %p101
        $region18: #{tpu_custom_call.1} parent=11 // pred_check_branch
          %491 = sbr.rel (%p489) target = $region20
        $region19: #{tpu_custom_call.1} parent=11 // pred_region
          %s493 = ssub.s32 128, 128
          %494 = vsyncadd [#allocation6], %s493
          %s496 = sshll.u32 [#allocation7], 4
          %s497 = int_to_ptr.vmem [resolvable:$true] %s496
          %499 = dma.hbm_to_vmem [thread:$0]  %s2, 128, %s497, [#allocation6]
        $region20: #{tpu_custom_call.1} parent=11 // pred_fallthru
          _
        // Predicated region
        $region21: #{tpu_custom_call.1} parent=11 // pred_check
          %p500 = pneg %p122
        $region22: #{tpu_custom_call.1} parent=11 // pred_check_branch
          %502 = sbr.rel (%p500) target = $region24
        $region23: #{tpu_custom_call.1} parent=11 // pred_region
          _
        $region24: #{tpu_custom_call.1} parent=11 // pred_fallthru
          _
        // Predicated region
        $region25: #{tpu_custom_call.1} parent=11 // pred_check
          %p503 = pneg %p143
        $region26: #{tpu_custom_call.1} parent=11 // pred_check_branch
          %505 = sbr.rel (%p503) target = $region28
        $region27: #{tpu_custom_call.1} parent=11 // pred_region
          _
        $region28: #{tpu_custom_call.1} parent=11 // pred_fallthru
          _
        // Predicated region
        $region29: #{tpu_custom_call.1} parent=11 // pred_check
          %p506 = pneg %p164
        $region30: #{tpu_custom_call.1} parent=11 // pred_check_branch
          %508 = sbr.rel (%p506) target = $region32
        $region31: #{tpu_custom_call.1} parent=11 // pred_region
          _
        $region32: #{tpu_custom_call.1} parent=11 // pred_fallthru
          _
        // Predicated region
        $region33: #{tpu_custom_call.1} parent=11 // pred_check
          %p509 = pneg %p185
        $region34: #{tpu_custom_call.1} parent=11 // pred_check_branch
          %511 = sbr.rel (%p509) target = $region36
        $region35: #{tpu_custom_call.1} parent=11 // pred_region
          _
        $region36: #{tpu_custom_call.1} parent=11 // pred_fallthru
          _
        // Predicated region
        $region37: #{tpu_custom_call.1} parent=11 // pred_check
          %p512 = pneg %p206
        $region38: #{tpu_custom_call.1} parent=11 // pred_check_branch
          %514 = sbr.rel (%p512) target = $region40
        $region39: #{tpu_custom_call.1} parent=11 // pred_region
          _
        $region40: #{tpu_custom_call.1} parent=11 // pred_fallthru
          _
        // Predicated region
        $region41: #{tpu_custom_call.1} parent=11 // pred_check
          %p515 = pneg %p227
        $region42: #{tpu_custom_call.1} parent=11 // pred_check_branch
          %517 = sbr.rel (%p515) target = $region44
        $region43: #{tpu_custom_call.1} parent=11 // pred_region
          _
        $region44: #{tpu_custom_call.1} parent=11 // pred_fallthru
          _
        // Predicated region
        $region45: #{tpu_custom_call.1} parent=11 // pred_check
          %p518 = pneg %p248
        $region46: #{tpu_custom_call.1} parent=11 // pred_check_branch
          %520 = sbr.rel (%p518) target = $region48
        $region47: #{tpu_custom_call.1} parent=11 // pred_region
          %s522 = ssub.s32 512, 512
          %523 = vsyncadd [#allocation9], %s522
          %s524 = sshll.u32 [#allocation8], 4
          %s525 = int_to_ptr.vmem [resolvable:$true] %s524
          %530 = dma.hbm_to_vmem [thread:$0]  %s9, 512, %s525, [#allocation9], 128, 128, 8
        $region48: #{tpu_custom_call.1} parent=11 // pred_fallthru
          _
        // Predicated region
        $region49: #{tpu_custom_call.1} parent=11 // pred_check
          %p531 = pneg %p269
        $region50: #{tpu_custom_call.1} parent=11 // pred_check_branch
          %533 = sbr.rel (%p531) target = $region52
        $region51: #{tpu_custom_call.1} parent=11 // pred_region
          _
        $region52: #{tpu_custom_call.1} parent=11 // pred_fallthru
          _
        // Predicated region
        $region53: #{tpu_custom_call.1} parent=11 // pred_check
          %p534 = pneg %p290
        $region54: #{tpu_custom_call.1} parent=11 // pred_check_branch
          %536 = sbr.rel (%p534) target = $region56
        $region55: #{tpu_custom_call.1} parent=11 // pred_region
          %s538 = ssub.s32 512, 512
          %539 = vsyncadd [#allocation9], %s538
          %s540 = sshll.u32 [#allocation10], 4
          %s541 = int_to_ptr.vmem [resolvable:$true] %s540
          %546 = dma.hbm_to_vmem [thread:$0]  %s11, 512, %s541, [#allocation9], 128, 128, 8
        $region56: #{tpu_custom_call.1} parent=11 // pred_fallthru
          _
        // Predicated region
        $region57: #{tpu_custom_call.1} parent=11 // pred_check
          %p547 = pneg %p311
        $region58: #{tpu_custom_call.1} parent=11 // pred_check_branch
          %549 = sbr.rel (%p547) target = $region60
        $region59: #{tpu_custom_call.1} parent=11 // pred_region
          _
        $region60: #{tpu_custom_call.1} parent=11 // pred_fallthru
          _
        // Predicated region
        $region61: #{tpu_custom_call.1} parent=11 // pred_check
          %p550 = pneg %p332
        $region62: #{tpu_custom_call.1} parent=11 // pred_check_branch
          %552 = sbr.rel (%p550) target = $region64
        $region63: #{tpu_custom_call.1} parent=11 // pred_region
          _
        $region64: #{tpu_custom_call.1} parent=11 // pred_fallthru
          _
        // Predicated region
        $region65: #{tpu_custom_call.1} parent=11 // pred_check
          %p553 = pneg %p353
        $region66: #{tpu_custom_call.1} parent=11 // pred_check_branch
          %555 = sbr.rel (%p553) target = $region68
        $region67: #{tpu_custom_call.1} parent=11 // pred_region
          _
        $region68: #{tpu_custom_call.1} parent=11 // pred_fallthru
          _
        // Predicated region
        $region69: #{tpu_custom_call.1} parent=11 // pred_check
          %p556 = pneg %p374
        $region70: #{tpu_custom_call.1} parent=11 // pred_check_branch
          %558 = sbr.rel (%p556) target = $region72
        $region71: #{tpu_custom_call.1} parent=11 // pred_region
          _
        $region72: #{tpu_custom_call.1} parent=11 // pred_fallthru
          _
        // Predicated region
        $region73: #{tpu_custom_call.1} parent=11 // pred_check
          %p559 = pneg %p395
        $region74: #{tpu_custom_call.1} parent=11 // pred_check_branch
          %561 = sbr.rel (%p559) target = $region76
        $region75: #{tpu_custom_call.1} parent=11 // pred_region
          _
        $region76: #{tpu_custom_call.1} parent=11 // pred_fallthru
          _
        // Predicated region
        $region77: #{tpu_custom_call.1} parent=11 // pred_check
          %p562 = pneg %p416
        $region78: #{tpu_custom_call.1} parent=11 // pred_check_branch
          %564 = sbr.rel (%p562) target = $region80
        $region79: #{tpu_custom_call.1} parent=11 // pred_region
          _
        $region80: #{tpu_custom_call.1} parent=11 // pred_fallthru
          _
        // Predicated region
        $region81: #{tpu_custom_call.1} parent=11 // pred_check
          %p565 = pneg %p437
        $region82: #{tpu_custom_call.1} parent=11 // pred_check_branch
          %567 = sbr.rel (%p565) target = $region84
        $region83: #{tpu_custom_call.1} parent=11 // pred_region
          _
        $region84: #{tpu_custom_call.1} parent=11 // pred_fallthru
          _
      $region12: #{tpu_custom_call.1} parent=5 // pred_fallthru
        _
      %p568 = scmp.lt.s32.totalorder %s33, 2
      // Predicated region
      $region85: #{tpu_custom_call.1} parent=5 // pred_check
        %p569 = pneg %p568
      $region86: #{tpu_custom_call.1} parent=5 // pred_check_branch
        %571 = sbr.rel (%p569) target = $region88
      $region87: #{tpu_custom_call.1} parent=5 // pred_region
        // Predicated region
        $region89: #{tpu_custom_call.1} parent=87 // pred_check
          %p572 = pneg %p53
        $region90: #{tpu_custom_call.1} parent=87 // pred_check_branch
          %574 = sbr.rel (%p572) target = $region92
        $region91: #{tpu_custom_call.1} parent=87 // pred_region
          %s575 = sand.u32 %s43, 1
          %s576 = scalar_lea.sflag [#allocation3], %s575
          %s577 = sand.u32 %s43, 1
          %s578 = smul.addr %s577, 8
          %s579 = scalar_lea.vmem [#allocation2], %s578
          %s581 = ssub.s32 128, 128
          %582 = vsyncadd %s576, %s581
          %s583 = smul.addr %s33, 128
          %s584 = scalar_lea.hbm %s0, %s583
          %s586 = sshll.u32 %s579, 4
          %s587 = int_to_ptr.vmem [resolvable:$true] %s586
          %589 = dma.hbm_to_vmem [thread:$0]  %s584, 128, %s587, %s576
        $region92: #{tpu_custom_call.1} parent=87 // pred_fallthru
          _
      $region88: #{tpu_custom_call.1} parent=5 // pred_fallthru
        _
      %p590 = scmp.le.s32.totalorder 1, %s33
      %p591 = scmp.lt.s32.totalorder %s33, 3
      %p592 = pnand %p590, %p591
      %p593 = pneg %p592
      // Predicated region
      $region93: #{tpu_custom_call.1} parent=5 // pred_check
        _
      $region94: #{tpu_custom_call.1} parent=5 // pred_check_branch
        %595 = sbr.rel (%p592) target = $region96
      $region95: #{tpu_custom_call.1} parent=5 // pred_region
        %s596 = ssub.s32 %s33, 1
        %s597 = sand.u32 %s46, 1
        %s598 = scalar_lea.sflag [#allocation3], %s597
        %s599 = sand.u32 %s46, 1
        %s600 = smul.addr %s599, 8
        %s601 = scalar_lea.vmem [#allocation2], %s600
        // Predicated region
        $region97: #{tpu_custom_call.1} parent=95 // pred_check
          %p602 = pneg %p59
        $region98: #{tpu_custom_call.1} parent=95 // pred_check_branch
          %604 = sbr.rel (%p602) target = $region100
        $region99: #{tpu_custom_call.1} parent=95 // pred_region
          %605 = dma.done %s598, 128
        $region100: #{tpu_custom_call.1} parent=95 // pred_fallthru
          _
        // Predicated region
        $region101: #{tpu_custom_call.1} parent=95 // pred_check
          %p606 = pneg %p80
        $region102: #{tpu_custom_call.1} parent=95 // pred_check_branch
          %608 = sbr.rel (%p606) target = $region104
        $region103: #{tpu_custom_call.1} parent=95 // pred_region
          %609 = dma.done [#allocation6], 128
        $region104: #{tpu_custom_call.1} parent=95 // pred_fallthru
          _
        // Predicated region
        $region105: #{tpu_custom_call.1} parent=95 // pred_check
          %p610 = pneg %p101
        $region106: #{tpu_custom_call.1} parent=95 // pred_check_branch
          %612 = sbr.rel (%p610) target = $region108
        $region107: #{tpu_custom_call.1} parent=95 // pred_region
          %613 = dma.done [#allocation6], 128
        $region108: #{tpu_custom_call.1} parent=95 // pred_fallthru
          _
        // Predicated region
        $region109: #{tpu_custom_call.1} parent=95 // pred_check
          %p614 = pneg %p248
        $region110: #{tpu_custom_call.1} parent=95 // pred_check_branch
          %616 = sbr.rel (%p614) target = $region112
        $region111: #{tpu_custom_call.1} parent=95 // pred_region
          %617 = dma.done [#allocation9], 512
        $region112: #{tpu_custom_call.1} parent=95 // pred_fallthru
          _
        // Predicated region
        $region113: #{tpu_custom_call.1} parent=95 // pred_check
          %p618 = pneg %p290
        $region114: #{tpu_custom_call.1} parent=95 // pred_check_branch
          %620 = sbr.rel (%p618) target = $region116
        $region115: #{tpu_custom_call.1} parent=95 // pred_region
          %621 = dma.done [#allocation9], 512
        $region116: #{tpu_custom_call.1} parent=95 // pred_fallthru
          _
        %s622 = sand.u32 %s46, 1
        %s623 = scalar_lea.sflag [#allocation3], %s622
        %s624 = sand.u32 %s46, 1
        %s625 = smul.addr %s624, 8
        %s626 = scalar_lea.vmem [#allocation2], %s625
        %p627 = pneg %p59
        %p628 = pneg %p56
        %p629 = pneg %p80
        %p630 = pneg %p77
        %p631 = pneg %p101
        %p632 = pneg %p98
        %p633 = pneg %p122
        %p634 = pneg %p119
        %p635 = pneg %p143
        %p636 = pneg %p140
        %p637 = pneg %p164
        %p638 = pneg %p161
        %p639 = pneg %p185
        %p640 = pneg %p182
        %p641 = pneg %p206
        %p642 = pneg %p203
        %p643 = pneg %p227
        %p644 = pneg %p224
        %p645 = pneg %p248
        %p646 = pneg %p245
        %p647 = pneg %p269
        %p648 = pneg %p266
        %p649 = pneg %p290
        %p650 = pneg %p287
        %p651 = pneg %p311
        %p652 = pneg %p308
        %p653 = pneg %p332
        %p654 = pneg %p329
        %p655 = pneg %p353
        %p656 = pneg %p350
        %p657 = pneg %p374
        %p658 = pneg %p371
        %p659 = pneg %p395
        %p660 = pneg %p392
        %p661 = pneg %p416
        %p662 = pneg %p413
        %p663 = pneg %p437
        %p664 = pneg %p434
        %p665 = pneg %p463
        %p666 = pneg %p460
        %s667 = sand.u32 %s450, 1
        %s668 = scalar_lea.sflag [#allocation4], %s667
        %s669 = sand.u32 %s450, 1
        %s670 = smul.addr %s669, 8
        %s671 = scalar_lea.vmem [#allocation11], %s670
        %v672 = vld [vmem:[%s601] sm:$0xff]
        %v673 = vld [vmem:[#allocation5] sm:$0xff]
        %675 = vrot.lane.b32.xlu0 %v673, 112
        %v676 = vpop.permute.xlu0 %675
        %v678 = vmul.f32 %v672, %v676
        %679 = vrot.lane.b32.xlu0 %v673, 16
        %v680 = vpop.permute.xlu0 %679
        %v682 = vmul.f32 %v672, %v680
        %684 = vrot.lane.b32.xlu0 %v682, 112
        %v685 = vpop.permute.xlu0 %684
        %v687 = vadd.f32 %v678, %v685
        %v688 = vmul.f32 %v672, %v673
        %690 = vrot.lane.b32.xlu0 %v688, 16
        %v691 = vpop.permute.xlu0 %690
        %v693 = vsub.f32 %v688, %v691
        %vm694 = vcmask 130048
        %v695 = vsel %vm694, %v687, %v693
        %v696 = vld [vmem:[%s5] sm:$0xff]
        %v697 = vld [vmem:[%s5 + $0x8] sm:$0xff]
        %v698 = vld [vmem:[%s5 + $0x10] sm:$0xff]
        %v699 = vld [vmem:[%s5 + $0x18] sm:$0xff]
        %v700 = vld [vmem:[%s6] sm:$0x1]
        %v702 = vlaneseq
        %v703 = vshrl.u32 %v702, 7
        %v704 = vsub.s32 0, %v703
        %v705 = vrot.slane %v700, %v704
        %vm707 = vcmask 261120
        %v709 = vsel %vm707, %v695, 0
        %711 = vmatprep.subr.mxu0 0.0
        %712 = vmatpush1.msra.mxu0 0.0
        %713 = vmatprep.subr.mxu0 0.0
        %714 = vmatpush1.msra.mxu0 0.0
        %715 = vmatprep.subr.mxu0 0.0
        %716 = vmatpush1.msra.mxu0 0.0
        %717 = vmatprep.subr.mxu0 0.0
        %718 = vmatpush1.msra.mxu0 0.0
        %719 = vmatprep.subr.mxu0 0.0
        %720 = vmatpush1.msra.mxu0 0.0
        %721 = vmatprep.subr.mxu0 0.0
        %722 = vmatpush1.msra.mxu0 0.0
        %723 = vmatprep.subr.mxu0 0.0
        %724 = vmatpush1.msra.mxu0 0.0
        %725 = vmatprep.subr.mxu0 0.0
        %726 = vmatpush1.msra.mxu0 0.0
        %727 = vmatprep.subr.mxu0 0.0
        %728 = vmatpush1.msra.mxu0 0.0
        %729 = vmatprep.subr.mxu0 0.0
        %730 = vmatpush1.msra.mxu0 0.0
        %731 = vmatprep.subr.mxu0 0.0
        %732 = vmatpush1.msra.mxu0 0.0
        %733 = vmatprep.subr.mxu0 0.0
        %734 = vmatpush1.msra.mxu0 0.0
        %735 = vmatprep.subr.mxu0 0.0
        %736 = vmatpush1.msra.mxu0 %v699
        %737 = vmatprep.subr.mxu0 0.0
        %738 = vmatpush1.msra.mxu0 %v698
        %739 = vmatprep.subr.mxu0 0.0
        %740 = vmatpush1.msra.mxu0 %v697
        %741 = vmatprep.subr.mxu0 0.0
        %742 = vmatpush1.msra.mxu0 %v696
        %743 = vmatprep.subr.mxu0 0.0
        %744 = vmatpush2.msra.mxu0 0.0
        %745 = vmatprep.subr.mxu0 0.0
        %746 = vmatpush2.msra.mxu0 0.0
        %747 = vmatprep.subr.mxu0 0.0
        %748 = vmatpush2.msra.mxu0 0.0
        %749 = vmatprep.subr.mxu0 0.0
        %750 = vmatpush2.msra.mxu0 0.0
        %751 = vmatprep.subr.mxu0 0.0
        %752 = vmatpush2.msra.mxu0 0.0
        %753 = vmatprep.subr.mxu0 0.0
        %754 = vmatpush2.msra.mxu0 0.0
        %755 = vmatprep.subr.mxu0 0.0
        %756 = vmatpush2.msra.mxu0 0.0
        %757 = vmatprep.subr.mxu0 0.0
        %758 = vmatpush2.msra.mxu0 0.0
        %759 = vmatprep.subr.mxu0 0.0
        %760 = vmatpush2.msra.mxu0 0.0
        %761 = vmatprep.subr.mxu0 0.0
        %762 = vmatpush2.msra.mxu0 0.0
        %763 = vmatprep.subr.mxu0 0.0
        %764 = vmatpush2.msra.mxu0 0.0
        %765 = vmatprep.subr.mxu0 0.0
        %766 = vmatpush2.msra.mxu0 0.0
        %767 = vmatprep.subr.mxu0 0.0
        %768 = vmatpush2.msra.mxu0 0.0
        %769 = vmatprep.subr.mxu0 0.0
        %770 = vmatpush2.msra.mxu0 0.0
        %771 = vmatprep.subr.mxu0 0.0
        %772 = vmatpush2.msra.mxu0 0.0
        %773 = vmatprep.subr.mxu0 0.0
        %774 = vmatpush2.msra.mxu0 0.0
        %775 = vmatprep.mubr.f32.mxu0 0.0
        %776 = vmatmul.mubr.f32.gmra.mxu0 %v709
        %v777 = vpop.f32.mrf.mxu0
        %v778 = vadd.f32 %v705, %v777
        %v779 = vpop.f32.mrf.mxu0
        %780 = vdwg.mxu0
        %v781 = vld [vmem:[%s7] sm:$0xff]
        %v782 = vld [vmem:[%s7 + $0x8] sm:$0xff]
        %v783 = vld [vmem:[%s7 + $0x10] sm:$0xff]
        %v784 = vld [vmem:[%s7 + $0x18] sm:$0xff]
        %v785 = vld [vmem:[%s8] sm:$0x1]
        %v787 = vlaneseq
        %v788 = vshrl.u32 %v787, 7
        %v789 = vsub.s32 0, %v788
        %v790 = vrot.slane %v785, %v789
        %v793 = vsel %vm707, %v672, 0
        %795 = vmatprep.subr.mxu0 0.0
        %796 = vmatpush1.msra.mxu0 0.0
        %797 = vmatprep.subr.mxu0 0.0
        %798 = vmatpush1.msra.mxu0 0.0
        %799 = vmatprep.subr.mxu0 0.0
        %800 = vmatpush1.msra.mxu0 0.0
        %801 = vmatprep.subr.mxu0 0.0
        %802 = vmatpush1.msra.mxu0 0.0
        %803 = vmatprep.subr.mxu0 0.0
        %804 = vmatpush1.msra.mxu0 0.0
        %805 = vmatprep.subr.mxu0 0.0
        %806 = vmatpush1.msra.mxu0 0.0
        %807 = vmatprep.subr.mxu0 0.0
        %808 = vmatpush1.msra.mxu0 0.0
        %809 = vmatprep.subr.mxu0 0.0
        %810 = vmatpush1.msra.mxu0 0.0
        %811 = vmatprep.subr.mxu0 0.0
        %812 = vmatpush1.msra.mxu0 0.0
        %813 = vmatprep.subr.mxu0 0.0
        %814 = vmatpush1.msra.mxu0 0.0
        %815 = vmatprep.subr.mxu0 0.0
        %816 = vmatpush1.msra.mxu0 0.0
        %817 = vmatprep.subr.mxu0 0.0
        %818 = vmatpush1.msra.mxu0 0.0
        %819 = vmatprep.subr.mxu0 0.0
        %820 = vmatpush1.msra.mxu0 %v784
        %821 = vmatprep.subr.mxu0 0.0
        %822 = vmatpush1.msra.mxu0 %v783
        %823 = vmatprep.subr.mxu0 0.0
        %824 = vmatpush1.msra.mxu0 %v782
        %825 = vmatprep.subr.mxu0 0.0
        %826 = vmatpush1.msra.mxu0 %v781
        %827 = vmatprep.subr.mxu0 0.0
        %828 = vmatpush2.msra.mxu0 0.0
        %829 = vmatprep.subr.mxu0 0.0
        %830 = vmatpush2.msra.mxu0 0.0
        %831 = vmatprep.subr.mxu0 0.0
        %832 = vmatpush2.msra.mxu0 0.0
        %833 = vmatprep.subr.mxu0 0.0
        %834 = vmatpush2.msra.mxu0 0.0
        %835 = vmatprep.subr.mxu0 0.0
        %836 = vmatpush2.msra.mxu0 0.0
        %837 = vmatprep.subr.mxu0 0.0
        %838 = vmatpush2.msra.mxu0 0.0
        %839 = vmatprep.subr.mxu0 0.0
        %840 = vmatpush2.msra.mxu0 0.0
        %841 = vmatprep.subr.mxu0 0.0
        %842 = vmatpush2.msra.mxu0 0.0
        %843 = vmatprep.subr.mxu0 0.0
        %844 = vmatpush2.msra.mxu0 0.0
        %845 = vmatprep.subr.mxu0 0.0
        %846 = vmatpush2.msra.mxu0 0.0
        %847 = vmatprep.subr.mxu0 0.0
        %848 = vmatpush2.msra.mxu0 0.0
        %849 = vmatprep.subr.mxu0 0.0
        %850 = vmatpush2.msra.mxu0 0.0
        %851 = vmatprep.subr.mxu0 0.0
        %852 = vmatpush2.msra.mxu0 0.0
        %853 = vmatprep.subr.mxu0 0.0
        %854 = vmatpush2.msra.mxu0 0.0
        %855 = vmatprep.subr.mxu0 0.0
        %856 = vmatpush2.msra.mxu0 0.0
        %857 = vmatprep.subr.mxu0 0.0
        %858 = vmatpush2.msra.mxu0 0.0
        %859 = vmatprep.mubr.f32.mxu0 0.0
        %860 = vmatmul.mubr.f32.gmra.mxu0 %v793
        %v861 = vpop.f32.mrf.mxu0
        %v862 = vadd.f32 %v790, %v861
        %v863 = vpop.f32.mrf.mxu0
        %864 = vdwg.mxu0
        %v865 = vld [vmem:[%s4] sm:$0xff]
        %v866 = vld [vmem:[%s4 + $0x8] sm:$0xff]
        %v867 = vld [vmem:[%s4 + $0x10] sm:$0xff]
        %v868 = vld [vmem:[%s4 + $0x18] sm:$0xff]
        %v869 = vmul.f32 %v778, %v865
        %v870 = vmul.f32 %v778, %v866
        %v871 = vmul.f32 %v778, %v867
        %v872 = vmul.f32 %v778, %v868
        %v873 = vld [vmem:[#allocation7] sm:$0xff]
        %s874 = scalar_lea.vmem %s3, %s38
        %v875 = vld [vmem:[%s874] sm:$0x1]
        %v876 = vlaneseq
        %v877 = vshrl.u32 %v876, 7
        %v878 = vsub.s32 0, %v877
        %v879 = vrot.slane %v875, %v878
        %v880 = vadd.f32 %v873, %v879
        %882 = vrot.lane.b32.xlu0 %v778, 96
        %v883 = vpop.permute.xlu0 %882
        %v885 = vsel %vm707, %v869, 0
        %v888 = vsel %vm707, %v870, 0
        %v891 = vsel %vm707, %v871, 0
        %v894 = vsel %vm707, %v872, 0
        %v896 = vsel %vm707, %v883, 0
        %898 = vmatprep.subr.mxu0 0.0
        %899 = vmatpush1.xpose.msra.mxu0 0.0
        %900 = vmatprep.subr.mxu0 0.0
        %901 = vmatpush1.xpose.msra.mxu0 0.0
        %902 = vmatprep.subr.mxu0 0.0
        %903 = vmatpush1.xpose.msra.mxu0 0.0
        %904 = vmatprep.subr.mxu0 0.0
        %905 = vmatpush1.xpose.msra.mxu0 0.0
        %906 = vmatprep.subr.mxu0 0.0
        %907 = vmatpush1.xpose.msra.mxu0 0.0
        %908 = vmatprep.subr.mxu0 0.0
        %909 = vmatpush1.xpose.msra.mxu0 0.0
        %910 = vmatprep.subr.mxu0 0.0
        %911 = vmatpush1.xpose.msra.mxu0 0.0
        %912 = vmatprep.subr.mxu0 0.0
        %913 = vmatpush1.xpose.msra.mxu0 0.0
        %914 = vmatprep.subr.mxu0 0.0
        %915 = vmatpush1.xpose.msra.mxu0 0.0
        %916 = vmatprep.subr.mxu0 0.0
        %917 = vmatpush1.xpose.msra.mxu0 0.0
        %918 = vmatprep.subr.mxu0 0.0
        %919 = vmatpush1.xpose.msra.mxu0 0.0
        %920 = vmatprep.subr.mxu0 0.0
        %921 = vmatpush1.xpose.msra.mxu0 0.0
        %922 = vmatprep.subr.mxu0 0.0
        %923 = vmatpush1.xpose.msra.mxu0 0.0
        %924 = vmatprep.subr.mxu0 0.0
        %925 = vmatpush1.xpose.msra.mxu0 0.0
        %926 = vmatprep.subr.mxu0 0.0
        %927 = vmatpush1.xpose.msra.mxu0 0.0
        %928 = vmatprep.subr.mxu0 0.0
        %929 = vmatpush1.xpose.msra.mxu0 %v896
        %930 = vmatprep.subr.mxu0 0.0
        %931 = vmatpush2.xpose.msra.mxu0 0.0
        %932 = vmatprep.subr.mxu0 0.0
        %933 = vmatpush2.xpose.msra.mxu0 0.0
        %934 = vmatprep.subr.mxu0 0.0
        %935 = vmatpush2.xpose.msra.mxu0 0.0
        %936 = vmatprep.subr.mxu0 0.0
        %937 = vmatpush2.xpose.msra.mxu0 0.0
        %938 = vmatprep.subr.mxu0 0.0
        %939 = vmatpush2.xpose.msra.mxu0 0.0
        %940 = vmatprep.subr.mxu0 0.0
        %941 = vmatpush2.xpose.msra.mxu0 0.0
        %942 = vmatprep.subr.mxu0 0.0
        %943 = vmatpush2.xpose.msra.mxu0 0.0
        %944 = vmatprep.subr.mxu0 0.0
        %945 = vmatpush2.xpose.msra.mxu0 0.0
        %946 = vmatprep.subr.mxu0 0.0
        %947 = vmatpush2.xpose.msra.mxu0 0.0
        %948 = vmatprep.subr.mxu0 0.0
        %949 = vmatpush2.xpose.msra.mxu0 0.0
        %950 = vmatprep.subr.mxu0 0.0
        %951 = vmatpush2.xpose.msra.mxu0 0.0
        %952 = vmatprep.subr.mxu0 0.0
        %953 = vmatpush2.xpose.msra.mxu0 0.0
        %954 = vmatprep.subr.mxu0 0.0
        %955 = vmatpush2.xpose.msra.mxu0 0.0
        %956 = vmatprep.subr.mxu0 0.0
        %957 = vmatpush2.xpose.msra.mxu0 0.0
        %958 = vmatprep.subr.mxu0 0.0
        %959 = vmatpush2.xpose.msra.mxu0 0.0
        %960 = vmatprep.subr.mxu0 0.0
        %961 = vmatpush2.xpose.msra.mxu0 0.0
        %962 = vmatprep.mubr.f32.mxu0 0.0
        %963 = vmatmul.mubr.f32.gmra.mxu0 %v885
        %v964 = vpop.f32.mrf.mxu0
        %v965 = vadd.f32 %v880, %v964
        %v966 = vpop.f32.mrf.mxu0
        %967 = vmatprep.mubr.f32.mxu0 0.0
        %968 = vmatmul.mubr.f32.gmra.mxu0 %v888
        %v969 = vpop.f32.mrf.mxu0
        %v970 = vadd.f32 %v880, %v969
        %v971 = vpop.f32.mrf.mxu0
        %972 = vmatprep.mubr.f32.mxu0 0.0
        %973 = vmatmul.mubr.f32.gmra.mxu0 %v891
        %v974 = vpop.f32.mrf.mxu0
        %v975 = vadd.f32 %v880, %v974
        %v976 = vpop.f32.mrf.mxu0
        %977 = vmatprep.mubr.f32.mxu0 0.0
        %978 = vmatmul.mubr.f32.gmra.mxu0 %v894
        %v979 = vpop.f32.mrf.mxu0
        %v980 = vadd.f32 %v880, %v979
        %v981 = vpop.f32.mrf.mxu0
        %982 = vdwg.mxu0
        %vm983 = vcmask 64512
        %v984 = vsel %vm983, %v965, -inf
        %985 = vmax.xlane.f32.xlu0 %v984
        %v986 = vpop.xlane.xlu0 %985
        %v987 = vsel %vm983, %v970, -inf
        %988 = vmax.xlane.f32.xlu0 %v987
        %v989 = vpop.xlane.xlu0 %988
        %v990 = vsel %vm983, %v975, -inf
        %991 = vmax.xlane.f32.xlu0 %v990
        %v992 = vpop.xlane.xlu0 %991
        %v993 = vsel %vm983, %v980, -inf
        %994 = vmax.xlane.f32.xlu0 %v993
        %v995 = vpop.xlane.xlu0 %994
        %v996 = vsub.f32 %v965, %v986
        %v997 = vsub.f32 %v970, %v989
        %v998 = vsub.f32 %v975, %v992
        %v999 = vsub.f32 %v980, %v995
        %v1000 = vmul.f32 %v996, 1.442695
        %v1001 = vpow.pop %v1000
        %v1002 = vmul.f32 %v997, 1.442695
        %v1003 = vpow.pop %v1002
        %v1004 = vmul.f32 %v998, 1.442695
        %v1005 = vpow.pop %v1004
        %v1006 = vmul.f32 %v999, 1.442695
        %v1007 = vpow.pop %v1006
        %v1008 = vsel %vm983, %v1001, 0.0
        %1009 = vadd.xlane.f32.xlu0 %v1008
        %v1010 = vpop.xlane.xlu0 %1009
        %v1011 = vsel %vm983, %v1003, 0.0
        %1012 = vadd.xlane.f32.xlu0 %v1011
        %v1013 = vpop.xlane.xlu0 %1012
        %v1014 = vsel %vm983, %v1005, 0.0
        %1015 = vadd.xlane.f32.xlu0 %v1014
        %v1016 = vpop.xlane.xlu0 %1015
        %v1017 = vsel %vm983, %v1007, 0.0
        %1018 = vadd.xlane.f32.xlu0 %v1017
        %v1019 = vpop.xlane.xlu0 %1018
        %v1020 = vrcp.pop %v1010
        %v1021 = vrcp.pop %v1013
        %v1022 = vrcp.pop %v1016
        %v1023 = vrcp.pop %v1019
        %v1024 = vmul.f32 %v1001, %v1020
        %v1025 = vmul.f32 %v1003, %v1021
        %v1026 = vmul.f32 %v1005, %v1022
        %v1027 = vmul.f32 %v1007, %v1023
        %v1029 = vsel %vm983, %v1024, 0
        %v1032 = vsel %vm983, %v1025, 0
        %v1035 = vsel %vm983, %v1026, 0
        %v1038 = vsel %vm983, %v1027, 0
        %1040 = vmatprep.subr.mxu0 0.0
        %1041 = vmatpush1.msra.mxu0 0.0
        %1042 = vmatprep.subr.mxu0 0.0
        %1043 = vmatpush1.msra.mxu0 0.0
        %1044 = vmatprep.subr.mxu0 0.0
        %1045 = vmatpush1.msra.mxu0 0.0
        %1046 = vmatprep.subr.mxu0 0.0
        %1047 = vmatpush1.msra.mxu0 0.0
        %1048 = vmatprep.subr.mxu0 0.0
        %1049 = vmatpush1.msra.mxu0 0.0
        %1050 = vmatprep.subr.mxu0 0.0
        %1051 = vmatpush1.msra.mxu0 0.0
        %1052 = vmatprep.subr.mxu0 0.0
        %1053 = vmatpush1.msra.mxu0 0.0
        %1054 = vmatprep.subr.mxu0 0.0
        %1055 = vmatpush1.msra.mxu0 0.0
        %1056 = vmatprep.subr.mxu0 0.0
        %1057 = vmatpush1.msra.mxu0 0.0
        %1058 = vmatprep.subr.mxu0 0.0
        %1059 = vmatpush1.msra.mxu0 0.0
        %1060 = vmatprep.subr.mxu0 0.0
        %1061 = vmatpush1.msra.mxu0 0.0
        %1062 = vmatprep.subr.mxu0 0.0
        %1063 = vmatpush1.msra.mxu0 0.0
        %1064 = vmatprep.subr.mxu0 0.0
        %1065 = vmatpush1.msra.mxu0 0.0
        %1066 = vmatprep.subr.mxu0 0.0
        %1067 = vmatpush1.msra.mxu0 0.0
        %1068 = vmatprep.subr.mxu0 0.0
        %1069 = vmatpush1.msra.mxu0 0.0
        %1070 = vmatprep.subr.mxu0 0.0
        %1071 = vmatpush1.msra.mxu0 %v862
        %1072 = vmatprep.subr.mxu0 0.0
        %1073 = vmatpush2.msra.mxu0 0.0
        %1074 = vmatprep.subr.mxu0 0.0
        %1075 = vmatpush2.msra.mxu0 0.0
        %1076 = vmatprep.subr.mxu0 0.0
        %1077 = vmatpush2.msra.mxu0 0.0
        %1078 = vmatprep.subr.mxu0 0.0
        %1079 = vmatpush2.msra.mxu0 0.0
        %1080 = vmatprep.subr.mxu0 0.0
        %1081 = vmatpush2.msra.mxu0 0.0
        %1082 = vmatprep.subr.mxu0 0.0
        %1083 = vmatpush2.msra.mxu0 0.0
        %1084 = vmatprep.subr.mxu0 0.0
        %1085 = vmatpush2.msra.mxu0 0.0
        %1086 = vmatprep.subr.mxu0 0.0
        %1087 = vmatpush2.msra.mxu0 0.0
        %1088 = vmatprep.subr.mxu0 0.0
        %1089 = vmatpush2.msra.mxu0 0.0
        %1090 = vmatprep.subr.mxu0 0.0
        %1091 = vmatpush2.msra.mxu0 0.0
        %1092 = vmatprep.subr.mxu0 0.0
        %1093 = vmatpush2.msra.mxu0 0.0
        %1094 = vmatprep.subr.mxu0 0.0
        %1095 = vmatpush2.msra.mxu0 0.0
        %1096 = vmatprep.subr.mxu0 0.0
        %1097 = vmatpush2.msra.mxu0 0.0
        %1098 = vmatprep.subr.mxu0 0.0
        %1099 = vmatpush2.msra.mxu0 0.0
        %1100 = vmatprep.subr.mxu0 0.0
        %1101 = vmatpush2.msra.mxu0 0.0
        %1102 = vmatprep.subr.mxu0 0.0
        %1103 = vmatpush2.msra.mxu0 0.0
        %1104 = vmatprep.mubr.f32.mxu0 0.0
        %1105 = vmatmul.mubr.f32.gmra.mxu0 %v1029
        %v1106 = vpop.f32.mrf.mxu0
        %v1107 = vadd.f32 0.0, %v1106
        %v1108 = vpop.f32.mrf.mxu0
        %1109 = vmatprep.mubr.f32.mxu0 0.0
        %1110 = vmatmul.mubr.f32.gmra.mxu0 %v1032
        %v1111 = vpop.f32.mrf.mxu0
        %v1112 = vadd.f32 0.0, %v1111
        %v1113 = vpop.f32.mrf.mxu0
        %1114 = vmatprep.mubr.f32.mxu0 0.0
        %1115 = vmatmul.mubr.f32.gmra.mxu0 %v1035
        %v1116 = vpop.f32.mrf.mxu0
        %v1117 = vadd.f32 0.0, %v1116
        %v1118 = vpop.f32.mrf.mxu0
        %1119 = vmatprep.mubr.f32.mxu0 0.0
        %1120 = vmatmul.mubr.f32.gmra.mxu0 %v1038
        %v1121 = vpop.f32.mrf.mxu0
        %v1122 = vadd.f32 0.0, %v1121
        %v1123 = vpop.f32.mrf.mxu0
        %1124 = vdwg.mxu0
        %v1125 = vmul.f32 %v1107, %v865
        %v1126 = vmul.f32 %v1112, %v866
        %v1127 = vmul.f32 %v1117, %v867
        %v1128 = vmul.f32 %v1122, %v868
        %v1129 = vadd.f32 %v1125, %v1126
        %v1130 = vadd.f32 %v1129, %v1127
        %v1131 = vadd.f32 %v1130, %v1128
        %v1132 = vld [vmem:[#allocation8] sm:$0xff]
        %v1133 = vld [vmem:[#allocation8 + $0x8] sm:$0xff]
        %v1134 = vld [vmem:[#allocation8 + $0x10] sm:$0xff]
        %v1135 = vld [vmem:[#allocation8 + $0x18] sm:$0xff]
        %v1136 = vld [vmem:[%s10] sm:$0x1]
        %v1138 = vlaneseq
        %v1139 = vshrl.u32 %v1138, 7
        %v1140 = vsub.s32 0, %v1139
        %v1141 = vrot.slane %v1136, %v1140
        %v1144 = vsel %vm707, %v1131, 0
        %1146 = vmatprep.subr.mxu0 0.0
        %1147 = vmatpush1.msra.mxu0 0.0
        %1148 = vmatprep.subr.mxu0 0.0
        %1149 = vmatpush1.msra.mxu0 0.0
        %1150 = vmatprep.subr.mxu0 0.0
        %1151 = vmatpush1.msra.mxu0 0.0
        %1152 = vmatprep.subr.mxu0 0.0
        %1153 = vmatpush1.msra.mxu0 0.0
        %1154 = vmatprep.subr.mxu0 0.0
        %1155 = vmatpush1.msra.mxu0 0.0
        %1156 = vmatprep.subr.mxu0 0.0
        %1157 = vmatpush1.msra.mxu0 0.0
        %1158 = vmatprep.subr.mxu0 0.0
        %1159 = vmatpush1.msra.mxu0 0.0
        %1160 = vmatprep.subr.mxu0 0.0
        %1161 = vmatpush1.msra.mxu0 0.0
        %1162 = vmatprep.subr.mxu0 0.0
        %1163 = vmatpush1.msra.mxu0 0.0
        %1164 = vmatprep.subr.mxu0 0.0
        %1165 = vmatpush1.msra.mxu0 0.0
        %1166 = vmatprep.subr.mxu0 0.0
        %1167 = vmatpush1.msra.mxu0 0.0
        %1168 = vmatprep.subr.mxu0 0.0
        %1169 = vmatpush1.msra.mxu0 0.0
        %1170 = vmatprep.subr.mxu0 0.0
        %1171 = vmatpush1.msra.mxu0 %v1135
        %1172 = vmatprep.subr.mxu0 0.0
        %1173 = vmatpush1.msra.mxu0 %v1134
        %1174 = vmatprep.subr.mxu0 0.0
        %1175 = vmatpush1.msra.mxu0 %v1133
        %1176 = vmatprep.subr.mxu0 0.0
        %1177 = vmatpush1.msra.mxu0 %v1132
        %1178 = vmatprep.subr.mxu0 0.0
        %1179 = vmatpush2.msra.mxu0 0.0
        %1180 = vmatprep.subr.mxu0 0.0
        %1181 = vmatpush2.msra.mxu0 0.0
        %1182 = vmatprep.subr.mxu0 0.0
        %1183 = vmatpush2.msra.mxu0 0.0
        %1184 = vmatprep.subr.mxu0 0.0
        %1185 = vmatpush2.msra.mxu0 0.0
        %1186 = vmatprep.subr.mxu0 0.0
        %1187 = vmatpush2.msra.mxu0 0.0
        %1188 = vmatprep.subr.mxu0 0.0
        %1189 = vmatpush2.msra.mxu0 0.0
        %1190 = vmatprep.subr.mxu0 0.0
        %1191 = vmatpush2.msra.mxu0 0.0
        %1192 = vmatprep.subr.mxu0 0.0
        %1193 = vmatpush2.msra.mxu0 0.0
        %1194 = vmatprep.subr.mxu0 0.0
        %1195 = vmatpush2.msra.mxu0 0.0
        %1196 = vmatprep.subr.mxu0 0.0
        %1197 = vmatpush2.msra.mxu0 0.0
        %1198 = vmatprep.subr.mxu0 0.0
        %1199 = vmatpush2.msra.mxu0 0.0
        %1200 = vmatprep.subr.mxu0 0.0
        %1201 = vmatpush2.msra.mxu0 0.0
        %1202 = vmatprep.subr.mxu0 0.0
        %1203 = vmatpush2.msra.mxu0 0.0
        %1204 = vmatprep.subr.mxu0 0.0
        %1205 = vmatpush2.msra.mxu0 0.0
        %1206 = vmatprep.subr.mxu0 0.0
        %1207 = vmatpush2.msra.mxu0 0.0
        %1208 = vmatprep.subr.mxu0 0.0
        %1209 = vmatpush2.msra.mxu0 0.0
        %1210 = vmatprep.mubr.f32.mxu0 0.0
        %1211 = vmatmul.mubr.f32.gmra.mxu0 %v1144
        %v1212 = vpop.f32.mrf.mxu0
        %v1213 = vadd.f32 %v1141, %v1212
        %v1214 = vpop.f32.mrf.mxu0
        %1215 = vdwg.mxu0
        %v1216 = vadd.f32 %v672, %v1213
        %v1217 = vsel %vm707, %v1216, 0.0
        %1218 = vadd.xlane.f32.xlu0 %v1217
        %v1219 = vpop.xlane.xlu0 %1218
        %v1220 = vrcp.pop 32.0
        %v1221 = vmul.f32 %v1219, %v1220
        %v1222 = vsub.f32 %v1216, %v1221
        %v1223 = vmul.f32 %v1222, %v1222
        %v1224 = vsel %vm707, %v1223, 0.0
        %1225 = vadd.xlane.f32.xlu0 %v1224
        %v1226 = vpop.xlane.xlu0 %1225
        %v1227 = vmul.f32 %v1226, %v1220
        %v1228 = vadd.f32 %v1227, 1e-05
        %v1229 = vrsqrt.pop %v1228
        %v1230 = vmul.f32 %v1222, %v1229
        %v1231 = vld [vmem:[%s15] sm:$0x1]
        %v1233 = vlaneseq
        %v1234 = vshrl.u32 %v1233, 7
        %v1235 = vsub.s32 0, %v1234
        %v1236 = vrot.slane %v1231, %v1235
        %v1238 = vmul.f32 %v1230, %v1236
        %v1239 = vld [vmem:[%s16] sm:$0x1]
        %v1241 = vlaneseq
        %v1242 = vshrl.u32 %v1241, 7
        %v1243 = vsub.s32 0, %v1242
        %v1244 = vrot.slane %v1239, %v1243
        %v1246 = vadd.f32 %v1238, %v1244
        %v1247 = vld [vmem:[#allocation10] sm:$0xff]
        %v1248 = vld [vmem:[#allocation10 + $0x8] sm:$0xff]
        %v1249 = vld [vmem:[#allocation10 + $0x10] sm:$0xff]
        %v1250 = vld [vmem:[#allocation10 + $0x18] sm:$0xff]
        %v1251 = vld [vmem:[%s12] sm:$0x1]
        %v1253 = vlaneseq
        %v1254 = vshrl.u32 %v1253, 7
        %v1255 = vsub.s32 0, %v1254
        %v1256 = vrot.slane %v1251, %v1255
        %v1259 = vsel %vm707, %v1246, 0
        %1261 = vmatprep.subr.mxu0 0.0
        %1262 = vmatpush1.msra.mxu0 0.0
        %1263 = vmatprep.subr.mxu0 0.0
        %1264 = vmatpush1.msra.mxu0 0.0
        %1265 = vmatprep.subr.mxu0 0.0
        %1266 = vmatpush1.msra.mxu0 0.0
        %1267 = vmatprep.subr.mxu0 0.0
        %1268 = vmatpush1.msra.mxu0 0.0
        %1269 = vmatprep.subr.mxu0 0.0
        %1270 = vmatpush1.msra.mxu0 0.0
        %1271 = vmatprep.subr.mxu0 0.0
        %1272 = vmatpush1.msra.mxu0 0.0
        %1273 = vmatprep.subr.mxu0 0.0
        %1274 = vmatpush1.msra.mxu0 0.0
        %1275 = vmatprep.subr.mxu0 0.0
        %1276 = vmatpush1.msra.mxu0 0.0
        %1277 = vmatprep.subr.mxu0 0.0
        %1278 = vmatpush1.msra.mxu0 0.0
        %1279 = vmatprep.subr.mxu0 0.0
        %1280 = vmatpush1.msra.mxu0 0.0
        %1281 = vmatprep.subr.mxu0 0.0
        %1282 = vmatpush1.msra.mxu0 0.0
        %1283 = vmatprep.subr.mxu0 0.0
        %1284 = vmatpush1.msra.mxu0 0.0
        %1285 = vmatprep.subr.mxu0 0.0
        %1286 = vmatpush1.msra.mxu0 %v1250
        %1287 = vmatprep.subr.mxu0 0.0
        %1288 = vmatpush1.msra.mxu0 %v1249
        %1289 = vmatprep.subr.mxu0 0.0
        %1290 = vmatpush1.msra.mxu0 %v1248
        %1291 = vmatprep.subr.mxu0 0.0
        %1292 = vmatpush1.msra.mxu0 %v1247
        %1293 = vmatprep.subr.mxu0 0.0
        %1294 = vmatpush2.msra.mxu0 0.0
        %1295 = vmatprep.subr.mxu0 0.0
        %1296 = vmatpush2.msra.mxu0 0.0
        %1297 = vmatprep.subr.mxu0 0.0
        %1298 = vmatpush2.msra.mxu0 0.0
        %1299 = vmatprep.subr.mxu0 0.0
        %1300 = vmatpush2.msra.mxu0 0.0
        %1301 = vmatprep.subr.mxu0 0.0
        %1302 = vmatpush2.msra.mxu0 0.0
        %1303 = vmatprep.subr.mxu0 0.0
        %1304 = vmatpush2.msra.mxu0 0.0
        %1305 = vmatprep.subr.mxu0 0.0
        %1306 = vmatpush2.msra.mxu0 0.0
        %1307 = vmatprep.subr.mxu0 0.0
        %1308 = vmatpush2.msra.mxu0 0.0
        %1309 = vmatprep.subr.mxu0 0.0
        %1310 = vmatpush2.msra.mxu0 0.0
        %1311 = vmatprep.subr.mxu0 0.0
        %1312 = vmatpush2.msra.mxu0 0.0
        %1313 = vmatprep.subr.mxu0 0.0
        %1314 = vmatpush2.msra.mxu0 0.0
        %1315 = vmatprep.subr.mxu0 0.0
        %1316 = vmatpush2.msra.mxu0 0.0
        %1317 = vmatprep.subr.mxu0 0.0
        %1318 = vmatpush2.msra.mxu0 0.0
        %1319 = vmatprep.subr.mxu0 0.0
        %1320 = vmatpush2.msra.mxu0 0.0
        %1321 = vmatprep.subr.mxu0 0.0
        %1322 = vmatpush2.msra.mxu0 0.0
        %1323 = vmatprep.subr.mxu0 0.0
        %1324 = vmatpush2.msra.mxu0 0.0
        %1325 = vmatprep.mubr.f32.mxu0 0.0
        %1326 = vmatmul.mubr.f32.gmra.mxu0 %v1259
        %v1327 = vpop.f32.mrf.mxu0
        %v1328 = vadd.f32 %v1256, %v1327
        %v1329 = vpop.f32.mrf.mxu0
        %1330 = vdwg.mxu0
        %v1331 = vmax.f32 %v1328, 0.0
        %v1332 = vld [vmem:[%s13] sm:$0xff]
        %v1333 = vld [vmem:[%s13 + $0x8] sm:$0xff]
        %v1334 = vld [vmem:[%s13 + $0x10] sm:$0xff]
        %v1335 = vld [vmem:[%s13 + $0x18] sm:$0xff]
        %v1336 = vld [vmem:[%s13 + $0x20] sm:$0xff]
        %v1337 = vld [vmem:[%s13 + $0x28] sm:$0xff]
        %v1338 = vld [vmem:[%s13 + $0x30] sm:$0xff]
        %v1339 = vld [vmem:[%s13 + $0x38] sm:$0xff]
        %v1340 = vld [vmem:[%s14] sm:$0x1]
        %v1342 = vlaneseq
        %v1343 = vshrl.u32 %v1342, 7
        %v1344 = vsub.s32 0, %v1343
        %v1345 = vrot.slane %v1340, %v1344
        %vm1347 = vcmask 523264
        %v1349 = vsel %vm1347, %v1331, 0
        %1351 = vmatprep.subr.mxu0 0.0
        %1352 = vmatpush1.msra.mxu0 0.0
        %1353 = vmatprep.subr.mxu0 0.0
        %1354 = vmatpush1.msra.mxu0 0.0
        %1355 = vmatprep.subr.mxu0 0.0
        %1356 = vmatpush1.msra.mxu0 0.0
        %1357 = vmatprep.subr.mxu0 0.0
        %1358 = vmatpush1.msra.mxu0 0.0
        %1359 = vmatprep.subr.mxu0 0.0
        %1360 = vmatpush1.msra.mxu0 0.0
        %1361 = vmatprep.subr.mxu0 0.0
        %1362 = vmatpush1.msra.mxu0 0.0
        %1363 = vmatprep.subr.mxu0 0.0
        %1364 = vmatpush1.msra.mxu0 0.0
        %1365 = vmatprep.subr.mxu0 0.0
        %1366 = vmatpush1.msra.mxu0 0.0
        %1367 = vmatprep.subr.mxu0 0.0
        %1368 = vmatpush1.msra.mxu0 %v1339
        %1369 = vmatprep.subr.mxu0 0.0
        %1370 = vmatpush1.msra.mxu0 %v1338
        %1371 = vmatprep.subr.mxu0 0.0
        %1372 = vmatpush1.msra.mxu0 %v1337
        %1373 = vmatprep.subr.mxu0 0.0
        %1374 = vmatpush1.msra.mxu0 %v1336
        %1375 = vmatprep.subr.mxu0 0.0
        %1376 = vmatpush1.msra.mxu0 %v1335
        %1377 = vmatprep.subr.mxu0 0.0
        %1378 = vmatpush1.msra.mxu0 %v1334
        %1379 = vmatprep.subr.mxu0 0.0
        %1380 = vmatpush1.msra.mxu0 %v1333
        %1381 = vmatprep.subr.mxu0 0.0
        %1382 = vmatpush1.msra.mxu0 %v1332
        %1383 = vmatprep.subr.mxu0 0.0
        %1384 = vmatpush2.msra.mxu0 0.0
        %1385 = vmatprep.subr.mxu0 0.0
        %1386 = vmatpush2.msra.mxu0 0.0
        %1387 = vmatprep.subr.mxu0 0.0
        %1388 = vmatpush2.msra.mxu0 0.0
        %1389 = vmatprep.subr.mxu0 0.0
        %1390 = vmatpush2.msra.mxu0 0.0
        %1391 = vmatprep.subr.mxu0 0.0
        %1392 = vmatpush2.msra.mxu0 0.0
        %1393 = vmatprep.subr.mxu0 0.0
        %1394 = vmatpush2.msra.mxu0 0.0
        %1395 = vmatprep.subr.mxu0 0.0
        %1396 = vmatpush2.msra.mxu0 0.0
        %1397 = vmatprep.subr.mxu0 0.0
        %1398 = vmatpush2.msra.mxu0 0.0
        %1399 = vmatprep.subr.mxu0 0.0
        %1400 = vmatpush2.msra.mxu0 0.0
        %1401 = vmatprep.subr.mxu0 0.0
        %1402 = vmatpush2.msra.mxu0 0.0
        %1403 = vmatprep.subr.mxu0 0.0
        %1404 = vmatpush2.msra.mxu0 0.0
        %1405 = vmatprep.subr.mxu0 0.0
        %1406 = vmatpush2.msra.mxu0 0.0
        %1407 = vmatprep.subr.mxu0 0.0
        %1408 = vmatpush2.msra.mxu0 0.0
        %1409 = vmatprep.subr.mxu0 0.0
        %1410 = vmatpush2.msra.mxu0 0.0
        %1411 = vmatprep.subr.mxu0 0.0
        %1412 = vmatpush2.msra.mxu0 0.0
        %1413 = vmatprep.subr.mxu0 0.0
        %1414 = vmatpush2.msra.mxu0 0.0
        %1415 = vmatprep.mubr.f32.mxu0 0.0
        %1416 = vmatmul.mubr.f32.gmra.mxu0 %v1349
        %v1417 = vpop.f32.mrf.mxu0
        %v1418 = vadd.f32 %v1345, %v1417
        %v1419 = vpop.f32.mrf.mxu0
        %1420 = vdwg.mxu0
        %v1421 = vadd.f32 %v1246, %v1418
        %v1422 = vsel %vm707, %v1421, 0.0
        %1423 = vadd.xlane.f32.xlu0 %v1422
        %v1424 = vpop.xlane.xlu0 %1423
        %v1425 = vmul.f32 %v1424, %v1220
        %v1426 = vsub.f32 %v1421, %v1425
        %v1427 = vmul.f32 %v1426, %v1426
        %v1428 = vsel %vm707, %v1427, 0.0
        %1429 = vadd.xlane.f32.xlu0 %v1428
        %v1430 = vpop.xlane.xlu0 %1429
        %v1431 = vmul.f32 %v1430, %v1220
        %v1432 = vadd.f32 %v1431, 1e-05
        %v1433 = vrsqrt.pop %v1432
        %v1434 = vmul.f32 %v1426, %v1433
        %v1435 = vld [vmem:[%s17] sm:$0x1]
        %v1437 = vlaneseq
        %v1438 = vshrl.u32 %v1437, 7
        %v1439 = vsub.s32 0, %v1438
        %v1440 = vrot.slane %v1435, %v1439
        %v1442 = vmul.f32 %v1434, %v1440
        %v1443 = vld [vmem:[%s18] sm:$0x1]
        %v1445 = vlaneseq
        %v1446 = vshrl.u32 %v1445, 7
        %v1447 = vsub.s32 0, %v1446
        %v1448 = vrot.slane %v1443, %v1447
        %v1450 = vadd.f32 %v1442, %v1448
        %1451 = vst.msk [vmem:[%s671] sm:$0xff] %vm707, %v1450
        %s1452 = sand.u32 %s450, 1
        %s1453 = scalar_lea.sflag [#allocation4], %s1452
        %s1454 = sand.u32 %s450, 1
        %s1455 = smul.addr %s1454, 8
        %s1456 = scalar_lea.vmem [#allocation11], %s1455
        // Predicated region
        $region117: #{tpu_custom_call.1} parent=95 // pred_check
          %p1457 = pneg %p460
        $region118: #{tpu_custom_call.1} parent=95 // pred_check_branch
          %1459 = sbr.rel (%p1457) target = $region120
        $region119: #{tpu_custom_call.1} parent=95 // pred_region
          %s1461 = ssub.s32 128, 128
          %1462 = vsyncadd %s1453, %s1461
          %s1463 = smul.addr %s38, 128
          %s1464 = scalar_lea.hbm %s19, %s1463
          %s1466 = sshll.u32 %s1456, 4
          %s1467 = int_to_ptr.vmem [resolvable:$true] %s1466
          %1469 = dma.vmem_to_hbm [thread:$0]  %s1467, 128, %s1464, %s1453
        $region120: #{tpu_custom_call.1} parent=95 // pred_fallthru
          _
      $region96: #{tpu_custom_call.1} parent=5 // pred_fallthru
        _
      %p1470 = scmp.le.s32.totalorder 2, %s33
      // Predicated region
      $region121: #{tpu_custom_call.1} parent=5 // pred_check
        %p1471 = pneg %p1470
      $region122: #{tpu_custom_call.1} parent=5 // pred_check_branch
        %1473 = sbr.rel (%p1471) target = $region124
      $region123: #{tpu_custom_call.1} parent=5 // pred_region
        %s1474 = ssub.s32 %s33, 2
        // Predicated region
        $region125: #{tpu_custom_call.1} parent=123 // pred_check
          %p1475 = pneg %p466
        $region126: #{tpu_custom_call.1} parent=123 // pred_check_branch
          %1477 = sbr.rel (%p1475) target = $region128
        $region127: #{tpu_custom_call.1} parent=123 // pred_region
          %s1478 = sand.u32 %s451, 1
          %s1479 = scalar_lea.sflag [#allocation4], %s1478
          %s1480 = sand.u32 %s451, 1
          %s1481 = smul.addr %s1480, 8
          %s1482 = scalar_lea.vmem [#allocation11], %s1481
          %1483 = dma.done %s1479, 128
        $region128: #{tpu_custom_call.1} parent=123 // pred_fallthru
          _
      $region124: #{tpu_custom_call.1} parent=5 // pred_fallthru
        _
    $region6: #{tpu_custom_call.1} parent=1 // loop_footer
      %s37 = sadd.s32 1, %s33
    $region7: #{tpu_custom_call.1} parent=1 // loop_footer_branch
      %32 = sbr.rel target = $region3
    $region8: #{tpu_custom_call.1} parent=1 // loop_exit
      _
    %1484 = vsyncpa [#allocation3], 1
    %s1485 = scalar_lea.sflag [#allocation3], 1
    %1486 = vsyncpa %s1485, 1
    %1487 = vsyncpa [#allocation6], 1
    %1488 = vsyncpa [#allocation9], 1
    %1489 = vsyncpa [#allocation4], 1
    %s1490 = scalar_lea.sflag [#allocation4], 1
    %1491 = vsyncpa %s1490, 1

</llo_original>
